<compile_context>
chip_gen: v6e
topology: v6e:2x2x1
jax: 0.10.0
libtpu: 0.0.40
codegen_flags: <defaults>
</compile_context>

<pallas_src>
import functools

import numpy as np
import jax
import jax.numpy as jnp
from jax.experimental import pallas as pl
from jax.experimental.pallas import tpu as pltpu


def _round_up(x, m):
    return (x + m - 1) // m * m


# ----------------------------------------------------------------------------
# Host-side constant builders (tiny, O(H2*W2))
# ----------------------------------------------------------------------------
def _build_tap_mask(H2, W2):
    """mask[t, i*W2+j] = 1 iff 3x3 tap (dh,dw)=(t//3,t%3) hits a valid pixel."""
    m = np.zeros((9, H2 * W2), np.float32)
    for dh in range(3):
        for dw in range(3):
            t = dh * 3 + dw
            ii = np.arange(H2)[:, None] + dh - 1
            jj = np.arange(W2)[None, :] + dw - 1
            valid = (ii >= 0) & (ii < H2) & (jj >= 0) & (jj < W2)
            m[t] = valid.astype(np.float32).reshape(-1)
    return jnp.asarray(m)


def _build_phase_mask(H2, W2):
    """pm[t, i*W2+j] = 1 iff (i%2, j%2) == (t//2, t%2)  (sub-pixel phase selector)."""
    pm = np.zeros((4, H2 * W2), np.float32)
    ii = np.arange(H2)[:, None]
    jj = np.arange(W2)[None, :]
    for kh in range(2):
        for kw in range(2):
            t = kh * 2 + kw
            pm[t] = (((ii % 2) == kh) & ((jj % 2) == kw)).astype(np.float32).reshape(-1)
    return jnp.asarray(pm)


# ----------------------------------------------------------------------------
# Kernel 1: fused deconv + concat + conv3x3/ReLU x2 + per-batch BN partial sums
# ----------------------------------------------------------------------------
def _unet_fused_kernel(upnn_ref, x_ref, wdec_ref, bup_ref, pmask_ref,
                       w1_ref, b1_ref, w2_ref, b2_ref, tmask_ref,
                       out_ref, sum_ref, ssq_ref, *, W2, co_pad):
    HW2 = pmask_ref.shape[1]

    # ---- ConvTranspose2d(k=2, s=2): one phase-stacked channel mix on the NN-
    # ---- replicated input, then phase-mask combine (no scatter matmul) -------
    y = jnp.dot(wdec_ref[...], upnn_ref[0],
                preferred_element_type=jnp.float32)            # (4*co_pad, HW2)
    pm = pmask_ref[...]                                        # (4, HW2)
    up_out = (y[0 * co_pad:1 * co_pad] * pm[0:1]
              + y[1 * co_pad:2 * co_pad] * pm[1:2]
              + y[2 * co_pad:3 * co_pad] * pm[2:3]
              + y[3 * co_pad:4 * co_pad] * pm[3:4]) + bup_ref[...]

    # ---- concat([upconv_out, x_in]) along channels (8-aligned sublane blocks) ----
    cat = jnp.concatenate([up_out, x_ref[0]], axis=0)          # (Ccat_pad, HW2)

    masks = tmask_ref[...]                                     # (9, HW2)

    # ---- 3x3 "same" conv + bias + ReLU via im2col: roll+mask taps, one MXU matmul ----
    def conv3x3_relu(x, w_mat, b_col):
        taps = []
        for t9 in range(9):
            dh, dw = t9 // 3, t9 % 3
            off = (dh - 1) * W2 + (dw - 1)
            if off == 0:
                taps.append(x)                                 # center tap: no roll/mask
            else:
                shifted = pltpu.roll(x, shift=(-off) % HW2, axis=1)
                taps.append(shifted * masks[t9:t9 + 1, :])     # circular wrap is masked
        patch = jnp.concatenate(taps, axis=0)                  # (9*Cin_pad, HW2)
        out = jnp.dot(w_mat, patch,
                      preferred_element_type=jnp.float32) + b_col
        return jnp.maximum(out, 0.0)

    h1 = conv3x3_relu(cat, w1_ref[...], b1_ref[...])           # (Cout_pad, HW2)
    h2 = conv3x3_relu(h1, w2_ref[...], b2_ref[...])            # (Cout_pad, HW2)

    # Per-batch output block (pipelined writeback) + streamed BN partial stats.
    out_ref[0] = h2
    sum_ref[0] = jnp.sum(h2, axis=1, keepdims=True)            # (Cout_pad, 1)
    ssq_ref[0] = jnp.sum(h2 * h2, axis=1, keepdims=True)       # (Cout_pad, 1)


# ----------------------------------------------------------------------------
# Kernel 2: apply BatchNorm scale/shift (per-channel affine)
# ----------------------------------------------------------------------------
def _bn_apply_kernel(h_ref, scale_ref, shift_ref, out_ref):
    out_ref[0] = h_ref[0] * scale_ref[...] + shift_ref[...]


# ----------------------------------------------------------------------------
# Wrapper: parameter re-layout (tiny, one-time) + two pallas_calls
# ----------------------------------------------------------------------------
@jax.jit
def unet_block_forward(up_in, x_in, params):
    B, Cup, H, W = up_in.shape
    Co = Cup // 2
    _, Cx, H2, W2 = x_in.shape
    assert H2 == 2 * H and W2 == 2 * W
    Cmid = Cx + Co
    Cout = Cmid // 2
    HW2 = H2 * W2
    eps = 1e-5

    # Channel padding to 8-sublane multiples (pad rows / K-columns are exact zeros).
    Cup_p = _round_up(Cup, 8)
    Co_p = _round_up(Co, 8)
    Cx_p = _round_up(Cx, 8)
    Ccat_p = Co_p + Cx_p
    Cout_p = _round_up(Cout, 8)

    # Nearest-replication ("sub-pixel") upsample of up_in done by XLA in the wrapper:
    # the deconv then reduces to a per-phase channel mix inside the kernel.
    up_nn = jnp.repeat(jnp.repeat(up_in, 2, axis=2), 2, axis=3)          # (B,Cup,H2,W2)
    up_nn = jnp.pad(up_nn, ((0, 0), (0, Cup_p - Cup), (0, 0), (0, 0)))
    up_nn = up_nn.reshape(B, Cup_p, HW2)
    x_flat = jnp.pad(x_in, ((0, 0), (0, Cx_p - Cx), (0, 0), (0, 0))).reshape(B, Cx_p, HW2)

    # ConvTranspose2d weight (Cin, Cout, kh, kw) -> phase-stacked (4*Co_p, Cup_p).
    w4 = jnp.transpose(params["w_up"], (2, 3, 1, 0)).reshape(4, Co, Cup)
    w4 = jnp.pad(w4, ((0, 0), (0, Co_p - Co), (0, Cup_p - Cup))).reshape(4 * Co_p, Cup_p)
    bup = jnp.pad(params["b_up"], (0, Co_p - Co)).reshape(Co_p, 1)

    # Conv2d weights (Cout, Cin, 3, 3) -> (Cout_p, 9*Cin_p), tap-major, padded channels zero.
    w1u = jnp.pad(params["w1"][:, :Co], ((0, Cout_p - Cout), (0, Co_p - Co), (0, 0), (0, 0)))
    w1x = jnp.pad(params["w1"][:, Co:], ((0, Cout_p - Cout), (0, Cx_p - Cx), (0, 0), (0, 0)))
    w1cat = jnp.concatenate([w1u, w1x], axis=1)                          # (Cout_p,Ccat_p,3,3)
    w1m = jnp.transpose(w1cat, (0, 2, 3, 1)).reshape(Cout_p, 9 * Ccat_p)
    b1 = jnp.pad(params["b1"], (0, Cout_p - Cout)).reshape(Cout_p, 1)
    w2p = jnp.pad(params["w2"], ((0, Cout_p - Cout), (0, Cout_p - Cout), (0, 0), (0, 0)))
    w2m = jnp.transpose(w2p, (0, 2, 3, 1)).reshape(Cout_p, 9 * Cout_p)
    b2 = jnp.pad(params["b2"], (0, Cout_p - Cout)).reshape(Cout_p, 1)
    gamma = jnp.pad(params["gamma"], (0, Cout_p - Cout)).reshape(Cout_p, 1)
    beta = jnp.pad(params["beta"], (0, Cout_p - Cout)).reshape(Cout_p, 1)

    pmask = _build_phase_mask(H2, W2)      # (4, HW2) constant
    tmask = _build_tap_mask(H2, W2)        # (9, HW2) constant

    cparams = pltpu.CompilerParams(
        dimension_semantics=("parallel",),          # per-batch independent -> 2-TC on v7x
        vmem_limit_bytes=32 * 1024 * 1024,
    )

    kernel1 = functools.partial(_unet_fused_kernel, W2=W2, co_pad=Co_p)
    h2, psum, psq = pl.pallas_call(
        kernel1,
        out_shape=(jax.ShapeDtypeStruct((B, Cout_p, HW2), jnp.float32),
                   jax.ShapeDtypeStruct((B, Cout_p, 1), jnp.float32),
                   jax.ShapeDtypeStruct((B, Cout_p, 1), jnp.float32)),
        grid=(B,),
        in_specs=[
            pl.BlockSpec((1, Cup_p, HW2), lambda b: (b, 0, 0)),
            pl.BlockSpec((1, Cx_p, HW2), lambda b: (b, 0, 0)),
            # Grid-invariant weights / masks (all tiny after removing the scatter matrix).
            pl.BlockSpec((4 * Co_p, Cup_p), lambda b: (0, 0)),
            pl.BlockSpec((Co_p, 1), lambda b: (0, 0)),
            pl.BlockSpec((4, HW2), lambda b: (0, 0)),
            pl.BlockSpec((Cout_p, 9 * Ccat_p), lambda b: (0, 0)),
            pl.BlockSpec((Cout_p, 1), lambda b: (0, 0)),
            pl.BlockSpec((Cout_p, 9 * Cout_p), lambda b: (0, 0)),
            pl.BlockSpec((Cout_p, 1), lambda b: (0, 0)),
            pl.BlockSpec((9, HW2), lambda b: (0, 0)),
        ],
        out_specs=(pl.BlockSpec((1, Cout_p, HW2), lambda b: (b, 0, 0)),
                   pl.BlockSpec((1, Cout_p, 1), lambda b: (b, 0, 0)),
                   pl.BlockSpec((1, Cout_p, 1), lambda b: (b, 0, 0))),
        compiler_params=cparams,
    )(up_nn, x_flat, w4, bup, pmask, w1m, b1, w2m, b2, tmask)

    # BatchNorm2d (training-mode batch statistics) from the streamed partial sums.
    count = B * HW2
    mean = jnp.sum(psum, axis=0) / count                         # (Cout_p, 1)
    var = jnp.sum(psq, axis=0) / count - mean * mean             # biased var (PyTorch norm)
    scale = gamma * jax.lax.rsqrt(var + eps)
    shift = beta - mean * scale

    out = pl.pallas_call(
        _bn_apply_kernel,
        out_shape=jax.ShapeDtypeStruct((B, Cout_p, HW2), jnp.float32),
        grid=(B,),
        in_specs=[pl.BlockSpec((1, Cout_p, HW2), lambda b: (b, 0, 0)),
                  pl.BlockSpec((Cout_p, 1), lambda b: (0, 0)),
                  pl.BlockSpec((Cout_p, 1), lambda b: (0, 0))],
        out_specs=pl.BlockSpec((1, Cout_p, HW2), lambda b: (b, 0, 0)),
        compiler_params=cparams,
    )(h2, scale, shift)

    return out[:, :Cout].reshape(B, Cout, H2, W2)


# ----------------------------------------------------------------------------
# Pure-JAX reference (PyTorch semantics) for correctness checking
# ----------------------------------------------------------------------------
def _conv_nchw_relu(x, w, b):
    y = jax.lax.conv_general_dilated(
        x, w, window_strides=(1, 1), padding=((1, 1), (1, 1)),
        dimension_numbers=("NCHW", "OIHW", "NCHW"),
        precision=jax.lax.Precision.HIGHEST)
    return jnp.maximum(y + b[None, :, None, None], 0.0)


def unet_block_reference(up_in, x_in, p):
    B, Cup, H, W = up_in.shape
    Co = Cup // 2
    t = jnp.einsum("bcij,cokl->boikjl", up_in, p["w_up"],
                   precision=jax.lax.Precision.HIGHEST)
    up_out = t.reshape(B, Co, 2 * H, 2 * W) + p["b_up"][None, :, None, None]
    cat = jnp.concatenate([up_out, x_in], axis=1)
    h1 = _conv_nchw_relu(cat, p["w1"], p["b1"])
    h2 = _conv_nchw_relu(h1, p["w2"], p["b2"])
    mean = jnp.mean(h2, axis=(0, 2, 3), keepdims=True)
    var = jnp.mean((h2 - mean) ** 2, axis=(0, 2, 3), keepdims=True)
    return ((h2 - mean) * jax.lax.rsqrt(var + 1e-5)
            * p["gamma"][None, :, None, None] + p["beta"][None, :, None, None])


# ----------------------------------------------------------------------------
if __name__ == "__main__":
    # UnetBlock(up_in_c=8, x_in_c=4); up_in spatial 8x8 -> upsampled to 16x16.
    B, up_in_c, x_in_c, H, W = 2, 8, 4, 8, 8
    c_up_out = up_in_c // 2                 # 4
    c_mid = x_in_c + c_up_out               # 8
    c_out = c_mid // 2                      # 4

    key = jax.random.PRNGKey(0)
    ks = jax.random.split(key, 8)
    up_in = jax.random.normal(ks[0], (B, up_in_c, H, W), jnp.float32)
    x_in = jax.random.normal(ks[1], (B, x_in_c, 2 * H, 2 * W), jnp.float32)

    params = {
        # ConvTranspose2d weight layout (Cin, Cout, kh, kw) -- PyTorch native
        "w_up": 0.1 * jax.random.normal(ks[2], (up_in_c, c_up_out, 2, 2), jnp.float32),
        "b_up": 0.1 * jax.random.normal(ks[3], (c_up_out,), jnp.float32),
        # Conv2d weight layout (Cout, Cin, kh, kw) -- PyTorch native
        "w1": 0.1 * jax.random.normal(ks[4], (c_out, c_mid, 3, 3), jnp.float32),
        "b1": 0.1 * jax.random.normal(ks[5], (c_out,), jnp.float32),
        "w2": 0.1 * jax.random.normal(ks[6], (c_out, c_out, 3, 3), jnp.float32),
        "b2": 0.1 * jax.random.normal(ks[7], (c_out,), jnp.float32),
        # BatchNorm affine params (PyTorch default init)
        "gamma": jnp.ones((c_out,), jnp.float32),
        "beta": jnp.zeros((c_out,), jnp.float32),
    }

    out = jax.block_until_ready(unet_block_forward(up_in, x_in, params))
    ref = jax.block_until_ready(unet_block_reference(up_in, x_in, params))

    assert out.shape == (B, c_out, 2 * H, 2 * W), out.shape
    np.testing.assert_allclose(np.asarray(out), np.asarray(ref), rtol=2e-4, atol=2e-4)
    print("KERNEL_OK")
</pallas_src>

<mosaic_0001>
module attributes {stable_mosaic.version = 11 : i64} {
  func.func @_bn_apply_kernel(%arg0: i32, %arg1: memref<1x8x256xf32, #tpu.memory_space<vmem>>, %arg2: memref<8x1xf32, #tpu.memory_space<vmem>>, %arg3: memref<8x1xf32, #tpu.memory_space<vmem>>, %arg4: memref<1x8x256xf32, #tpu.memory_space<vmem>>) attributes {dimension_semantics = [#tpu.dimension_semantics<parallel>], iteration_bounds = array<i64: 2>, scalar_prefetch = 0 : i64, scratch_operands = 0 : i64, tpu.core_type = #tpu.core_type<tc>, window_params = [{transform_indices = @transform_0, window_bounds = array<i64: 1, 8, 256>}, {pipeline_mode = #tpu.pipeline_mode<synchronous>, transform_indices = @transform_1, window_bounds = array<i64: 8, 1>}, {pipeline_mode = #tpu.pipeline_mode<synchronous>, transform_indices = @transform_2, window_bounds = array<i64: 8, 1>}, {transform_indices = @transform_3, window_bounds = array<i64: 1, 8, 256>}]} {
    %c0 = arith.constant 0 : index
    %c0_0 = arith.constant 0 : index
    %c0_1 = arith.constant 0 : index
    %0 = vector.load %arg1[%c0, %c0_0, %c0_1] : memref<1x8x256xf32, #tpu.memory_space<vmem>>, vector<1x8x256xf32>
    %1 = vector.shape_cast %0 : vector<1x8x256xf32> to vector<8x256xf32>
    %c0_2 = arith.constant 0 : index
    %c0_3 = arith.constant 0 : index
    %2 = vector.load %arg2[%c0_2, %c0_3] : memref<8x1xf32, #tpu.memory_space<vmem>>, vector<8x1xf32>
    %3 = vector.broadcast %2 : vector<8x1xf32> to vector<8x256xf32>
    %4 = arith.mulf %1, %3 : vector<8x256xf32>
    %c0_4 = arith.constant 0 : index
    %c0_5 = arith.constant 0 : index
    %5 = vector.load %arg3[%c0_4, %c0_5] : memref<8x1xf32, #tpu.memory_space<vmem>>, vector<8x1xf32>
    %6 = vector.broadcast %5 : vector<8x1xf32> to vector<8x256xf32>
    %7 = arith.addf %4, %6 : vector<8x256xf32>
    %c0_6 = arith.constant 0 : index
    %c0_7 = arith.constant 0 : index
    %c0_8 = arith.constant 0 : index
    %8 = vector.load %arg4[%c0_6, %c0_7, %c0_8] : memref<1x8x256xf32, #tpu.memory_space<vmem>>, vector<1x8x256xf32>
    %9 = vector.shape_cast %8 : vector<1x8x256xf32> to vector<8x256xf32>
    %10 = vector.shape_cast %7 : vector<8x256xf32> to vector<1x8x256xf32>
    tpu.vector_store %arg4[%c0_6, %c0_7, %c0_8], %10 {strides = array<i32>} : memref<1x8x256xf32, #tpu.memory_space<vmem>>, vector<1x8x256xf32>,
    return
  }
  func.func @transform_0(%arg0: i32) -> (i32, i32, i32) {
    %c0_i32 = arith.constant 0 : i32
    %c0_i32_0 = arith.constant 0 : i32
    %c0_i32_1 = arith.constant 0 : i32
    return %arg0, %c0_i32, %c0_i32_0 : i32, i32, i32
  }
  func.func @transform_1(%arg0: i32) -> (i32, i32) {
    %c0_i32 = arith.constant 0 : i32
    %c0_i32_0 = arith.constant 0 : i32
    %c0_i32_1 = arith.constant 0 : i32
    return %c0_i32, %c0_i32_0 : i32, i32
  }
  func.func @transform_2(%arg0: i32) -> (i32, i32) {
    %c0_i32 = arith.constant 0 : i32
    %c0_i32_0 = arith.constant 0 : i32
    %c0_i32_1 = arith.constant 0 : i32
    return %c0_i32, %c0_i32_0 : i32, i32
  }
  func.func @transform_3(%arg0: i32) -> (i32, i32, i32) {
    %c0_i32 = arith.constant 0 : i32
    %c0_i32_0 = arith.constant 0 : i32
    %c0_i32_1 = arith.constant 0 : i32
    return %arg0, %c0_i32, %c0_i32_0 : i32, i32, i32
  }
}

module attributes {stable_mosaic.version = 11 : i64} {
  func.func @_unet_fused_kernel(%arg0: i32, %arg1: memref<1x8x256xf32, #tpu.memory_space<vmem>>, %arg2: memref<1x8x256xf32, #tpu.memory_space<vmem>>, %arg3: memref<32x8xf32, #tpu.memory_space<vmem>>, %arg4: memref<8x1xf32, #tpu.memory_space<vmem>>, %arg5: memref<4x256xf32, #tpu.memory_space<vmem>>, %arg6: memref<8x144xf32, #tpu.memory_space<vmem>>, %arg7: memref<8x1xf32, #tpu.memory_space<vmem>>, %arg8: memref<8x72xf32, #tpu.memory_space<vmem>>, %arg9: memref<8x1xf32, #tpu.memory_space<vmem>>, %arg10: memref<9x256xf32, #tpu.memory_space<vmem>>, %arg11: memref<1x8x256xf32, #tpu.memory_space<vmem>>, %arg12: memref<1x8x1xf32, #tpu.memory_space<vmem>>, %arg13: memref<1x8x1xf32, #tpu.memory_space<vmem>>) attributes {dimension_semantics = [#tpu.dimension_semantics<parallel>], iteration_bounds = array<i64: 2>, scalar_prefetch = 0 : i64, scratch_operands = 0 : i64, tpu.core_type = #tpu.core_type<tc>, window_params = [{transform_indices = @transform_0, window_bounds = array<i64: 1, 8, 256>}, {transform_indices = @transform_1, window_bounds = array<i64: 1, 8, 256>}, {pipeline_mode = #tpu.pipeline_mode<synchronous>, transform_indices = @transform_2, window_bounds = array<i64: 32, 8>}, {pipeline_mode = #tpu.pipeline_mode<synchronous>, transform_indices = @transform_3, window_bounds = array<i64: 8, 1>}, {pipeline_mode = #tpu.pipeline_mode<synchronous>, transform_indices = @transform_4, window_bounds = array<i64: 4, 256>}, {pipeline_mode = #tpu.pipeline_mode<synchronous>, transform_indices = @transform_5, window_bounds = array<i64: 8, 144>}, {pipeline_mode = #tpu.pipeline_mode<synchronous>, transform_indices = @transform_6, window_bounds = array<i64: 8, 1>}, {pipeline_mode = #tpu.pipeline_mode<synchronous>, transform_indices = @transform_7, window_bounds = array<i64: 8, 72>}, {pipeline_mode = #tpu.pipeline_mode<synchronous>, transform_indices = @transform_8, window_bounds = array<i64: 8, 1>}, {pipeline_mode = #tpu.pipeline_mode<synchronous>, transform_indices = @transform_9, window_bounds = array<i64: 9, 256>}, {transform_indices = @transform_10, window_bounds = array<i64: 1, 8, 256>}, {transform_indices = @transform_11, window_bounds = array<i64: 1, 8, 1>}, {transform_indices = @transform_12, window_bounds = array<i64: 1, 8, 1>}]} {
    %c0 = arith.constant 0 : index
    %c0_0 = arith.constant 0 : index
    %0 = vector.load %arg3[%c0, %c0_0] : memref<32x8xf32, #tpu.memory_space<vmem>>, vector<32x8xf32>
    %c0_1 = arith.constant 0 : index
    %c0_2 = arith.constant 0 : index
    %c0_3 = arith.constant 0 : index
    %1 = vector.load %arg1[%c0_1, %c0_2, %c0_3] : memref<1x8x256xf32, #tpu.memory_space<vmem>>, vector<1x8x256xf32>
    %2 = vector.shape_cast %1 : vector<1x8x256xf32> to vector<8x256xf32>
    %cst = arith.constant dense<0.000000e+00> : vector<32x256xf32>
    %3 = tpu.matmul %0, %2, %cst {dimension_numbers = #tpu.dot_dimension_numbers<[1], [0], [0], [1], [0, 0, 1, 1], [], []>} : vector<32x8xf32>, vector<8x256xf32>, vector<32x256xf32> -> vector<32x256xf32>
    %c0_4 = arith.constant 0 : index
    %c0_5 = arith.constant 0 : index
    %4 = vector.load %arg5[%c0_4, %c0_5] : memref<4x256xf32, #tpu.memory_space<vmem>>, vector<4x256xf32>
    %5 = vector.extract_strided_slice %3 {offsets = [0, 0], sizes = [8, 256], strides = [1, 1]} : vector<32x256xf32> to vector<8x256xf32>
    %6 = vector.extract_strided_slice %4 {offsets = [0, 0], sizes = [1, 256], strides = [1, 1]} : vector<4x256xf32> to vector<1x256xf32>
    %7 = vector.broadcast %6 : vector<1x256xf32> to vector<8x256xf32>
    %8 = arith.mulf %5, %7 : vector<8x256xf32>
    %9 = vector.extract_strided_slice %3 {offsets = [8, 0], sizes = [8, 256], strides = [1, 1]} : vector<32x256xf32> to vector<8x256xf32>
    %10 = vector.extract_strided_slice %4 {offsets = [1, 0], sizes = [1, 256], strides = [1, 1]} : vector<4x256xf32> to vector<1x256xf32>
    %11 = vector.broadcast %10 : vector<1x256xf32> to vector<8x256xf32>
    %12 = arith.mulf %9, %11 : vector<8x256xf32>
    %13 = arith.addf %8, %12 : vector<8x256xf32>
    %14 = vector.extract_strided_slice %3 {offsets = [16, 0], sizes = [8, 256], strides = [1, 1]} : vector<32x256xf32> to vector<8x256xf32>
    %15 = vector.extract_strided_slice %4 {offsets = [2, 0], sizes = [1, 256], strides = [1, 1]} : vector<4x256xf32> to vector<1x256xf32>
    %16 = vector.broadcast %15 : vector<1x256xf32> to vector<8x256xf32>
    %17 = arith.mulf %14, %16 : vector<8x256xf32>
    %18 = arith.addf %13, %17 : vector<8x256xf32>
    %19 = vector.extract_strided_slice %3 {offsets = [24, 0], sizes = [8, 256], strides = [1, 1]} : vector<32x256xf32> to vector<8x256xf32>
    %20 = vector.extract_strided_slice %4 {offsets = [3, 0], sizes = [1, 256], strides = [1, 1]} : vector<4x256xf32> to vector<1x256xf32>
    %21 = vector.broadcast %20 : vector<1x256xf32> to vector<8x256xf32>
    %22 = arith.mulf %19, %21 : vector<8x256xf32>
    %23 = arith.addf %18, %22 : vector<8x256xf32>
    %c0_6 = arith.constant 0 : index
    %c0_7 = arith.constant 0 : index
    %24 = vector.load %arg4[%c0_6, %c0_7] : memref<8x1xf32, #tpu.memory_space<vmem>>, vector<8x1xf32>
    %25 = vector.broadcast %24 : vector<8x1xf32> to vector<8x256xf32>
    %26 = arith.addf %23, %25 : vector<8x256xf32>
    %c0_8 = arith.constant 0 : index
    %c0_9 = arith.constant 0 : index
    %c0_10 = arith.constant 0 : index
    %27 = vector.load %arg2[%c0_8, %c0_9, %c0_10] : memref<1x8x256xf32, #tpu.memory_space<vmem>>, vector<1x8x256xf32>
    %28 = vector.shape_cast %27 : vector<1x8x256xf32> to vector<8x256xf32>
    %29 = tpu.concatenate %26, %28 in 0 : vector<8x256xf32>, vector<8x256xf32> -> vector<16x256xf32>
    %c0_11 = arith.constant 0 : index
    %c0_12 = arith.constant 0 : index
    %30 = vector.load %arg10[%c0_11, %c0_12] : memref<9x256xf32, #tpu.memory_space<vmem>>, vector<9x256xf32>
    %c0_13 = arith.constant 0 : index
    %c0_14 = arith.constant 0 : index
    %31 = vector.load %arg6[%c0_13, %c0_14] : memref<8x144xf32, #tpu.memory_space<vmem>>, vector<8x144xf32>
    %c0_15 = arith.constant 0 : index
    %c0_16 = arith.constant 0 : index
    %32 = vector.load %arg7[%c0_15, %c0_16] : memref<8x1xf32, #tpu.memory_space<vmem>>, vector<8x1xf32>
    %c17_i32 = arith.constant 17 : i32
    %33 = tpu.dynamic_rotate %29 by %c17_i32 dim 1 : vector<16x256xf32>, i32 -> vector<16x256xf32>
    %34 = vector.extract_strided_slice %30 {offsets = [0, 0], sizes = [1, 256], strides = [1, 1]} : vector<9x256xf32> to vector<1x256xf32>
    %35 = vector.broadcast %34 : vector<1x256xf32> to vector<16x256xf32>
    %36 = arith.mulf %33, %35 : vector<16x256xf32>
    %c16_i32 = arith.constant 16 : i32
    %37 = tpu.dynamic_rotate %29 by %c16_i32 dim 1 : vector<16x256xf32>, i32 -> vector<16x256xf32>
    %38 = vector.extract_strided_slice %30 {offsets = [1, 0], sizes = [1, 256], strides = [1, 1]} : vector<9x256xf32> to vector<1x256xf32>
    %39 = vector.broadcast %38 : vector<1x256xf32> to vector<16x256xf32>
    %40 = arith.mulf %37, %39 : vector<16x256xf32>
    %c15_i32 = arith.constant 15 : i32
    %41 = tpu.dynamic_rotate %29 by %c15_i32 dim 1 : vector<16x256xf32>, i32 -> vector<16x256xf32>
    %42 = vector.extract_strided_slice %30 {offsets = [2, 0], sizes = [1, 256], strides = [1, 1]} : vector<9x256xf32> to vector<1x256xf32>
    %43 = vector.broadcast %42 : vector<1x256xf32> to vector<16x256xf32>
    %44 = arith.mulf %41, %43 : vector<16x256xf32>
    %c1_i32 = arith.constant 1 : i32
    %45 = tpu.dynamic_rotate %29 by %c1_i32 dim 1 : vector<16x256xf32>, i32 -> vector<16x256xf32>
    %46 = vector.extract_strided_slice %30 {offsets = [3, 0], sizes = [1, 256], strides = [1, 1]} : vector<9x256xf32> to vector<1x256xf32>
    %47 = vector.broadcast %46 : vector<1x256xf32> to vector<16x256xf32>
    %48 = arith.mulf %45, %47 : vector<16x256xf32>
    %c255_i32 = arith.constant 255 : i32
    %49 = tpu.dynamic_rotate %29 by %c255_i32 dim 1 : vector<16x256xf32>, i32 -> vector<16x256xf32>
    %50 = vector.extract_strided_slice %30 {offsets = [5, 0], sizes = [1, 256], strides = [1, 1]} : vector<9x256xf32> to vector<1x256xf32>
    %51 = vector.broadcast %50 : vector<1x256xf32> to vector<16x256xf32>
    %52 = arith.mulf %49, %51 : vector<16x256xf32>
    %c241_i32 = arith.constant 241 : i32
    %53 = tpu.dynamic_rotate %29 by %c241_i32 dim 1 : vector<16x256xf32>, i32 -> vector<16x256xf32>
    %54 = vector.extract_strided_slice %30 {offsets = [6, 0], sizes = [1, 256], strides = [1, 1]} : vector<9x256xf32> to vector<1x256xf32>
    %55 = vector.broadcast %54 : vector<1x256xf32> to vector<16x256xf32>
    %56 = arith.mulf %53, %55 : vector<16x256xf32>
    %c240_i32 = arith.constant 240 : i32
    %57 = tpu.dynamic_rotate %29 by %c240_i32 dim 1 : vector<16x256xf32>, i32 -> vector<16x256xf32>
    %58 = vector.extract_strided_slice %30 {offsets = [7, 0], sizes = [1, 256], strides = [1, 1]} : vector<9x256xf32> to vector<1x256xf32>
    %59 = vector.broadcast %58 : vector<1x256xf32> to vector<16x256xf32>
    %60 = arith.mulf %57, %59 : vector<16x256xf32>
    %c239_i32 = arith.constant 239 : i32
    %61 = tpu.dynamic_rotate %29 by %c239_i32 dim 1 : vector<16x256xf32>, i32 -> vector<16x256xf32>
    %62 = vector.extract_strided_slice %30 {offsets = [8, 0], sizes = [1, 256], strides = [1, 1]} : vector<9x256xf32> to vector<1x256xf32>
    %63 = vector.broadcast %62 : vector<1x256xf32> to vector<16x256xf32>
    %64 = arith.mulf %61, %63 : vector<16x256xf32>
    %65 = tpu.concatenate %36, %40, %44, %48, %29, %52, %56, %60, %64 in 0 : vector<16x256xf32>, vector<16x256xf32>, vector<16x256xf32>, vector<16x256xf32>, vector<16x256xf32>, vector<16x256xf32>, vector<16x256xf32>, vector<16x256xf32>, vector<16x256xf32> -> vector<144x256xf32>
    %cst_17 = arith.constant dense<0.000000e+00> : vector<8x256xf32>
    %66 = tpu.matmul %31, %65, %cst_17 {dimension_numbers = #tpu.dot_dimension_numbers<[1], [0], [0], [1], [0, 0, 1, 1], [], []>} : vector<8x144xf32>, vector<144x256xf32>, vector<8x256xf32> -> vector<8x256xf32>
    %67 = vector.broadcast %32 : vector<8x1xf32> to vector<8x256xf32>
    %68 = arith.addf %66, %67 : vector<8x256xf32>
    %cst_18 = arith.constant 0.000000e+00 : f32
    %69 = vector.broadcast %cst_18 : f32 to vector<8x256xf32>
    %70 = arith.maximumf %68, %69 : vector<8x256xf32>
    %c0_19 = arith.constant 0 : index
    %c0_20 = arith.constant 0 : index
    %71 = vector.load %arg8[%c0_19, %c0_20] : memref<8x72xf32, #tpu.memory_space<vmem>>, vector<8x72xf32>
    %c0_21 = arith.constant 0 : index
    %c0_22 = arith.constant 0 : index
    %72 = vector.load %arg9[%c0_21, %c0_22] : memref<8x1xf32, #tpu.memory_space<vmem>>, vector<8x1xf32>
    %c17_i32_23 = arith.constant 17 : i32
    %73 = tpu.dynamic_rotate %70 by %c17_i32_23 dim 1 : vector<8x256xf32>, i32 -> vector<8x256xf32>
    %74 = vector.extract_strided_slice %30 {offsets = [0, 0], sizes = [1, 256], strides = [1, 1]} : vector<9x256xf32> to vector<1x256xf32>
    %75 = vector.broadcast %74 : vector<1x256xf32> to vector<8x256xf32>
    %76 = arith.mulf %73, %75 : vector<8x256xf32>
    %c16_i32_24 = arith.constant 16 : i32
    %77 = tpu.dynamic_rotate %70 by %c16_i32_24 dim 1 : vector<8x256xf32>, i32 -> vector<8x256xf32>
    %78 = vector.extract_strided_slice %30 {offsets = [1, 0], sizes = [1, 256], strides = [1, 1]} : vector<9x256xf32> to vector<1x256xf32>
    %79 = vector.broadcast %78 : vector<1x256xf32> to vector<8x256xf32>
    %80 = arith.mulf %77, %79 : vector<8x256xf32>
    %c15_i32_25 = arith.constant 15 : i32
    %81 = tpu.dynamic_rotate %70 by %c15_i32_25 dim 1 : vector<8x256xf32>, i32 -> vector<8x256xf32>
    %82 = vector.extract_strided_slice %30 {offsets = [2, 0], sizes = [1, 256], strides = [1, 1]} : vector<9x256xf32> to vector<1x256xf32>
    %83 = vector.broadcast %82 : vector<1x256xf32> to vector<8x256xf32>
    %84 = arith.mulf %81, %83 : vector<8x256xf32>
    %c1_i32_26 = arith.constant 1 : i32
    %85 = tpu.dynamic_rotate %70 by %c1_i32_26 dim 1 : vector<8x256xf32>, i32 -> vector<8x256xf32>
    %86 = vector.extract_strided_slice %30 {offsets = [3, 0], sizes = [1, 256], strides = [1, 1]} : vector<9x256xf32> to vector<1x256xf32>
    %87 = vector.broadcast %86 : vector<1x256xf32> to vector<8x256xf32>
    %88 = arith.mulf %85, %87 : vector<8x256xf32>
    %c255_i32_27 = arith.constant 255 : i32
    %89 = tpu.dynamic_rotate %70 by %c255_i32_27 dim 1 : vector<8x256xf32>, i32 -> vector<8x256xf32>
    %90 = vector.extract_strided_slice %30 {offsets = [5, 0], sizes = [1, 256], strides = [1, 1]} : vector<9x256xf32> to vector<1x256xf32>
    %91 = vector.broadcast %90 : vector<1x256xf32> to vector<8x256xf32>
    %92 = arith.mulf %89, %91 : vector<8x256xf32>
    %c241_i32_28 = arith.constant 241 : i32
    %93 = tpu.dynamic_rotate %70 by %c241_i32_28 dim 1 : vector<8x256xf32>, i32 -> vector<8x256xf32>
    %94 = vector.extract_strided_slice %30 {offsets = [6, 0], sizes = [1, 256], strides = [1, 1]} : vector<9x256xf32> to vector<1x256xf32>
    %95 = vector.broadcast %94 : vector<1x256xf32> to vector<8x256xf32>
    %96 = arith.mulf %93, %95 : vector<8x256xf32>
    %c240_i32_29 = arith.constant 240 : i32
    %97 = tpu.dynamic_rotate %70 by %c240_i32_29 dim 1 : vector<8x256xf32>, i32 -> vector<8x256xf32>
    %98 = vector.extract_strided_slice %30 {offsets = [7, 0], sizes = [1, 256], strides = [1, 1]} : vector<9x256xf32> to vector<1x256xf32>
    %99 = vector.broadcast %98 : vector<1x256xf32> to vector<8x256xf32>
    %100 = arith.mulf %97, %99 : vector<8x256xf32>
    %c239_i32_30 = arith.constant 239 : i32
    %101 = tpu.dynamic_rotate %70 by %c239_i32_30 dim 1 : vector<8x256xf32>, i32 -> vector<8x256xf32>
    %102 = vector.extract_strided_slice %30 {offsets = [8, 0], sizes = [1, 256], strides = [1, 1]} : vector<9x256xf32> to vector<1x256xf32>
    %103 = vector.broadcast %102 : vector<1x256xf32> to vector<8x256xf32>
    %104 = arith.mulf %101, %103 : vector<8x256xf32>
    %105 = tpu.concatenate %76, %80, %84, %88, %70, %92, %96, %100, %104 in 0 : vector<8x256xf32>, vector<8x256xf32>, vector<8x256xf32>, vector<8x256xf32>, vector<8x256xf32>, vector<8x256xf32>, vector<8x256xf32>, vector<8x256xf32>, vector<8x256xf32> -> vector<72x256xf32>
    %cst_31 = arith.constant dense<0.000000e+00> : vector<8x256xf32>
    %106 = tpu.matmul %71, %105, %cst_31 {dimension_numbers = #tpu.dot_dimension_numbers<[1], [0], [0], [1], [0, 0, 1, 1], [], []>} : vector<8x72xf32>, vector<72x256xf32>, vector<8x256xf32> -> vector<8x256xf32>
    %107 = vector.broadcast %72 : vector<8x1xf32> to vector<8x256xf32>
    %108 = arith.addf %106, %107 : vector<8x256xf32>
    %cst_32 = arith.constant 0.000000e+00 : f32
    %109 = vector.broadcast %cst_32 : f32 to vector<8x256xf32>
    %110 = arith.maximumf %108, %109 : vector<8x256xf32>
    %c0_33 = arith.constant 0 : index
    %c0_34 = arith.constant 0 : index
    %c0_35 = arith.constant 0 : index
    %111 = vector.load %arg11[%c0_33, %c0_34, %c0_35] : memref<1x8x256xf32, #tpu.memory_space<vmem>>, vector<1x8x256xf32>
    %112 = vector.shape_cast %111 : vector<1x8x256xf32> to vector<8x256xf32>
    %113 = vector.shape_cast %110 : vector<8x256xf32> to vector<1x8x256xf32>
    tpu.vector_store %arg11[%c0_33, %c0_34, %c0_35], %113 {strides = array<i32>} : memref<1x8x256xf32, #tpu.memory_space<vmem>>, vector<1x8x256xf32>,
    %cst_36 = arith.constant dense<0.000000e+00> : vector<8xf32>
    %114 = vector.multi_reduction <add>, %110, %cst_36 [1] : vector<8x256xf32> to vector<8xf32>
    %115 = vector.shape_cast %114 : vector<8xf32> to vector<8x1xf32>
    %c0_37 = arith.constant 0 : index
    %c0_38 = arith.constant 0 : index
    %c0_39 = arith.constant 0 : index
    %116 = vector.load %arg12[%c0_37, %c0_38, %c0_39] : memref<1x8x1xf32, #tpu.memory_space<vmem>>, vector<1x8x1xf32>
    %117 = vector.shape_cast %116 : vector<1x8x1xf32> to vector<8x1xf32>
    %118 = vector.shape_cast %115 : vector<8x1xf32> to vector<1x8x1xf32>
    tpu.vector_store %arg12[%c0_37, %c0_38, %c0_39], %118 {strides = array<i32>} : memref<1x8x1xf32, #tpu.memory_space<vmem>>, vector<1x8x1xf32>,
    %119 = arith.mulf %110, %110 : vector<8x256xf32>
    %cst_40 = arith.constant dense<0.000000e+00> : vector<8xf32>
    %120 = vector.multi_reduction <add>, %119, %cst_40 [1] : vector<8x256xf32> to vector<8xf32>
    %121 = vector.shape_cast %120 : vector<8xf32> to vector<8x1xf32>
    %c0_41 = arith.constant 0 : index
    %c0_42 = arith.constant 0 : index
    %c0_43 = arith.constant 0 : index
    %122 = vector.load %arg13[%c0_41, %c0_42, %c0_43] : memref<1x8x1xf32, #tpu.memory_space<vmem>>, vector<1x8x1xf32>
    %123 = vector.shape_cast %122 : vector<1x8x1xf32> to vector<8x1xf32>
    %124 = vector.shape_cast %121 : vector<8x1xf32> to vector<1x8x1xf32>
    tpu.vector_store %arg13[%c0_41, %c0_42, %c0_43], %124 {strides = array<i32>} : memref<1x8x1xf32, #tpu.memory_space<vmem>>, vector<1x8x1xf32>,
    return
  }
  func.func @transform_0(%arg0: i32) -> (i32, i32, i32) {
    %c0_i32 = arith.constant 0 : i32
    %c0_i32_0 = arith.constant 0 : i32
    %c0_i32_1 = arith.constant 0 : i32
    return %arg0, %c0_i32, %c0_i32_0 : i32, i32, i32
  }
  func.func @transform_1(%arg0: i32) -> (i32, i32, i32) {
    %c0_i32 = arith.constant 0 : i32
    %c0_i32_0 = arith.constant 0 : i32
    %c0_i32_1 = arith.constant 0 : i32
    return %arg0, %c0_i32, %c0_i32_0 : i32, i32, i32
  }
  func.func @transform_2(%arg0: i32) -> (i32, i32) {
    %c0_i32 = arith.constant 0 : i32
    %c0_i32_0 = arith.constant 0 : i32
    %c0_i32_1 = arith.constant 0 : i32
    return %c0_i32, %c0_i32_0 : i32, i32
  }
  func.func @transform_3(%arg0: i32) -> (i32, i32) {
    %c0_i32 = arith.constant 0 : i32
    %c0_i32_0 = arith.constant 0 : i32
    %c0_i32_1 = arith.constant 0 : i32
    return %c0_i32, %c0_i32_0 : i32, i32
  }
  func.func @transform_4(%arg0: i32) -> (i32, i32) {
    %c0_i32 = arith.constant 0 : i32
    %c0_i32_0 = arith.constant 0 : i32
    %c0_i32_1 = arith.constant 0 : i32
    return %c0_i32, %c0_i32_0 : i32, i32
  }
  func.func @transform_5(%arg0: i32) -> (i32, i32) {
    %c0_i32 = arith.constant 0 : i32
    %c0_i32_0 = arith.constant 0 : i32
    %c0_i32_1 = arith.constant 0 : i32
    return %c0_i32, %c0_i32_0 : i32, i32
  }
  func.func @transform_6(%arg0: i32) -> (i32, i32) {
    %c0_i32 = arith.constant 0 : i32
    %c0_i32_0 = arith.constant 0 : i32
    %c0_i32_1 = arith.constant 0 : i32
    return %c0_i32, %c0_i32_0 : i32, i32
  }
  func.func @transform_7(%arg0: i32) -> (i32, i32) {
    %c0_i32 = arith.constant 0 : i32
    %c0_i32_0 = arith.constant 0 : i32
    %c0_i32_1 = arith.constant 0 : i32
    return %c0_i32, %c0_i32_0 : i32, i32
  }
  func.func @transform_8(%arg0: i32) -> (i32, i32) {
    %c0_i32 = arith.constant 0 : i32
    %c0_i32_0 = arith.constant 0 : i32
    %c0_i32_1 = arith.constant 0 : i32
    return %c0_i32, %c0_i32_0 : i32, i32
  }
  func.func @transform_9(%arg0: i32) -> (i32, i32) {
    %c0_i32 = arith.constant 0 : i32
    %c0_i32_0 = arith.constant 0 : i32
    %c0_i32_1 = arith.constant 0 : i32
    return %c0_i32, %c0_i32_0 : i32, i32
  }
  func.func @transform_10(%arg0: i32) -> (i32, i32, i32) {
    %c0_i32 = arith.constant 0 : i32
    %c0_i32_0 = arith.constant 0 : i32
    %c0_i32_1 = arith.constant 0 : i32
    return %arg0, %c0_i32, %c0_i32_0 : i32, i32, i32
  }
  func.func @transform_11(%arg0: i32) -> (i32, i32, i32) {
    %c0_i32 = arith.constant 0 : i32
    %c0_i32_0 = arith.constant 0 : i32
    %c0_i32_1 = arith.constant 0 : i32
    return %arg0, %c0_i32, %c0_i32_0 : i32, i32, i32
  }
  func.func @transform_12(%arg0: i32) -> (i32, i32, i32) {
    %c0_i32 = arith.constant 0 : i32
    %c0_i32_0 = arith.constant 0 : i32
    %c0_i32_1 = arith.constant 0 : i32
    return %arg0, %c0_i32, %c0_i32_0 : i32, i32, i32
  }
}

</mosaic_0001>

<llo_original>
// kernel: unet_block_forward.3
$region0: #{unet_block_forward.3}
  #allocation0 [shape = 'u32[]', space=smem, size = 0x4, offset = 0x4, fixed_abs, tag = 'smem constant byte address 0x4 - core index']
  #allocation1 [shape = 'u32[144,128]{1,0:T(1,128)}', space=vmem, size = 0x12000, scoped, tag = 'internal scratch']
  %s0 = inlined_call_operand.vmem [shape: f32[2,8,256], index: 0, kind: input, shape index: {}]
  %s1 = inlined_call_operand.vmem [shape: f32[8,1], index: 1, kind: input, shape index: {}]
  %s2 = inlined_call_operand.vmem [shape: f32[8,1], index: 2, kind: input, shape index: {}]
  %s3 = inlined_call_operand.vmem [shape: f32[2,8,256], index: 3, kind: output, shape index: {}]
  %s4 = sld [smem:[#allocation0]]
  $region45: #{unet_block_forward.3} parent=0
    _
  %s6 = ssub.s32 1, %s4
  %s7 = scalar_select 0, %s6, %s4
  loop: start=0, step=1, limit=4
  $region2: #{unet_block_forward.3} parent=0 // loop_pre_header
    _
  $region3: #{unet_block_forward.3} parent=0 // loop_header
    %s9 = sphi 0, %s13
    %p10 = scmp.ge.s32.totalorder %s9, 4
    %s19 = sphi 0, %s21
    %s22 = sphi 0, %s19
    %s23 = sphi 0, %s22
    %s39 = sphi 0, %s23
    %s43 = sphi 0, %s43
    %s45 = sphi 0, %s43
    %s46 = sphi 0, %s45
    %s60 = sphi 0, %s46
    %s64 = sphi 0, %s64
    %s66 = sphi 0, %s64
    %s67 = sphi 0, %s66
    %s81 = sphi 0, %s67
    %s87 = sphi 0, %s89
    %s90 = sphi 0, %s87
    %s91 = sphi 0, %s90
    %s107 = sphi 0, %s91
  $region4: #{unet_block_forward.3} parent=0 // loop_header_branch
    %12 = sbr.rel (%p10) target = $region8
  $region5: #{unet_block_forward.3} parent=0 // loop_body
    %s14 = ssub.s32 %s9, 1
    %s15 = ssub.s32 %s9, 2
    %s16 = sadd.s32 %s9, 1
    %s17 = ssub.s32 %s9, %s16
    %p18 = scmp.eq.s32.totalorder %s17, 0
    %s20 = sadd.s32 %s19, 1
    %s21 = scalar_select %p18, %s19, %s20
    %p24 = pneg %p18
    %p25 = scmp.eq.s32.totalorder %s9, 1
    %p26 = por %p24, %p25
    %p27 = scmp.ne.s32.totalorder %s19, %s22
    %p28 = scmp.eq.s32.totalorder %s9, 0
    %p29 = por %p27, %p28
    %p30 = scmp.ne.s32.totalorder %s19, %s22
    %p31 = scmp.eq.s32.totalorder %s14, 1
    %p32 = por %p30, %p31
    %p33 = scmp.ne.s32.totalorder %s22, %s23
    %p34 = scmp.eq.s32.totalorder %s14, 0
    %p35 = por %p33, %p34
    %p36 = scmp.ne.s32.totalorder %s22, %s23
    %p37 = scmp.eq.s32.totalorder %s15, 1
    %p38 = por %p36, %p37
    %p40 = scmp.ne.s32.totalorder %s23, %s39
    %p41 = scmp.eq.s32.totalorder %s15, 0
    %p42 = por %p40, %p41
    %s44 = sadd.s32 %s43, 1
    %p47 = scmp.eq.s32.totalorder %s9, 1
    %p48 = scmp.ne.s32.totalorder %s43, %s45
    %p49 = scmp.eq.s32.totalorder %s9, 0
    %p50 = por %p48, %p49
    %p51 = scmp.ne.s32.totalorder %s43, %s45
    %p52 = scmp.eq.s32.totalorder %s14, 1
    %p53 = por %p51, %p52
    %p54 = scmp.ne.s32.totalorder %s45, %s46
    %p55 = scmp.eq.s32.totalorder %s14, 0
    %p56 = por %p54, %p55
    %p57 = scmp.ne.s32.totalorder %s45, %s46
    %p58 = scmp.eq.s32.totalorder %s15, 1
    %p59 = por %p57, %p58
    %p61 = scmp.ne.s32.totalorder %s46, %s60
    %p62 = scmp.eq.s32.totalorder %s15, 0
    %p63 = por %p61, %p62
    %s65 = sadd.s32 %s64, 1
    %p68 = scmp.eq.s32.totalorder %s9, 1
    %p69 = scmp.ne.s32.totalorder %s64, %s66
    %p70 = scmp.eq.s32.totalorder %s9, 0
    %p71 = por %p69, %p70
    %p72 = scmp.ne.s32.totalorder %s64, %s66
    %p73 = scmp.eq.s32.totalorder %s14, 1
    %p74 = por %p72, %p73
    %p75 = scmp.ne.s32.totalorder %s66, %s67
    %p76 = scmp.eq.s32.totalorder %s14, 0
    %p77 = por %p75, %p76
    %p78 = scmp.ne.s32.totalorder %s66, %s67
    %p79 = scmp.eq.s32.totalorder %s15, 1
    %p80 = por %p78, %p79
    %p82 = scmp.ne.s32.totalorder %s67, %s81
    %p83 = scmp.eq.s32.totalorder %s15, 0
    %p84 = por %p82, %p83
    %s85 = ssub.s32 %s9, %s16
    %p86 = scmp.eq.s32.totalorder %s85, 0
    %s88 = sadd.s32 %s87, 1
    %s89 = scalar_select %p86, %s87, %s88
    %p92 = pneg %p86
    %p93 = scmp.eq.s32.totalorder %s9, 1
    %p94 = por %p92, %p93
    %p95 = scmp.ne.s32.totalorder %s87, %s90
    %p96 = scmp.eq.s32.totalorder %s9, 0
    %p97 = por %p95, %p96
    %p98 = scmp.ne.s32.totalorder %s87, %s90
    %p99 = scmp.eq.s32.totalorder %s14, 1
    %p100 = por %p98, %p99
    %p101 = scmp.ne.s32.totalorder %s90, %s91
    %p102 = scmp.eq.s32.totalorder %s14, 0
    %p103 = por %p101, %p102
    %p104 = scmp.ne.s32.totalorder %s90, %s91
    %p105 = scmp.eq.s32.totalorder %s15, 1
    %p106 = por %p104, %p105
    %p108 = scmp.ne.s32.totalorder %s91, %s107
    %p109 = scmp.eq.s32.totalorder %s15, 0
    %p110 = por %p108, %p109
    %p111 = scmp.le.s32.totalorder 1, %s9
    %p112 = scmp.lt.s32.totalorder %s9, 3
    %p113 = pnand %p111, %p112
    %p114 = pneg %p113
    // Predicated region
    $region9: #{unet_block_forward.3} parent=5 // pred_check
      _
    $region10: #{unet_block_forward.3} parent=5 // pred_check_branch
      %116 = sbr.rel (%p113) target = $region12
    $region11: #{unet_block_forward.3} parent=5 // pred_region
      %s117 = ssub.s32 %s9, 1
      // Predicated region
      $region13: #{unet_block_forward.3} parent=11 // pred_check
        %p118 = pneg %p56
      $region14: #{unet_block_forward.3} parent=11 // pred_check_branch
        %120 = sbr.rel (%p118) target = $region16
      $region15: #{unet_block_forward.3} parent=11 // pred_region
        _
      $region16: #{unet_block_forward.3} parent=11 // pred_fallthru
        _
      // Predicated region
      $region17: #{unet_block_forward.3} parent=11 // pred_check
        %p121 = pneg %p77
      $region18: #{unet_block_forward.3} parent=11 // pred_check_branch
        %123 = sbr.rel (%p121) target = $region20
      $region19: #{unet_block_forward.3} parent=11 // pred_region
        _
      $region20: #{unet_block_forward.3} parent=11 // pred_fallthru
        _
    $region12: #{unet_block_forward.3} parent=5 // pred_fallthru
      _
    %p124 = scmp.lt.s32.totalorder %s9, 2
    // Predicated region
    $region21: #{unet_block_forward.3} parent=5 // pred_check
      %p125 = pneg %p124
    $region22: #{unet_block_forward.3} parent=5 // pred_check_branch
      %127 = sbr.rel (%p125) target = $region24
    $region23: #{unet_block_forward.3} parent=5 // pred_region
      // Predicated region
      $region25: #{unet_block_forward.3} parent=23 // pred_check
        %p128 = pneg %p29
      $region26: #{unet_block_forward.3} parent=23 // pred_check_branch
        %130 = sbr.rel (%p128) target = $region28
      $region27: #{unet_block_forward.3} parent=23 // pred_region
        %p131 = scmp.lt.s32.totalorder %s9, 1
        %s132 = scalar_select %p131, %s9, 1
        %s133 = smul.addr %s132, 2
        %s134 = smul.addr %s133, 8
        %s135 = scalar_lea.vmem %s0, %s134
      $region28: #{unet_block_forward.3} parent=23 // pred_fallthru
        _
    $region24: #{unet_block_forward.3} parent=5 // pred_fallthru
      _
    %p136 = scmp.le.s32.totalorder 1, %s9
    %p137 = scmp.lt.s32.totalorder %s9, 3
    %p138 = pnand %p136, %p137
    %p139 = pneg %p138
    // Predicated region
    $region29: #{unet_block_forward.3} parent=5 // pred_check
      _
    $region30: #{unet_block_forward.3} parent=5 // pred_check_branch
      %141 = sbr.rel (%p138) target = $region32
    $region31: #{unet_block_forward.3} parent=5 // pred_region
      %s142 = ssub.s32 %s9, 1
      %p143 = scmp.lt.s32.totalorder %s14, 1
      %s144 = scalar_select %p143, %s14, 1
      %s145 = smul.addr %s144, 2
      %s146 = smul.addr %s145, 8
      %s147 = scalar_lea.vmem %s0, %s146
      %p148 = pneg %p35
      %p149 = pneg %p32
      %p150 = pneg %p56
      %p151 = pneg %p53
      %p152 = pneg %p77
      %p153 = pneg %p74
      %p154 = pneg %p103
      %p155 = pneg %p100
      %p156 = scmp.lt.s32.totalorder %s14, 1
      %s157 = scalar_select %p156, %s14, 1
      %s158 = smul.addr %s157, 2
      %s159 = smul.addr %s158, 8
      %s160 = scalar_lea.vmem %s3, %s159
      %p161 = scmp.lt.s32.totalorder %s14, 1
      %s162 = scalar_select %p161, %s14, 1
      %s163 = smul.addr %s162, 2
      %s164 = smul.addr %s163, 8
      %s165 = scalar_lea.vmem %s0, %s164
      %p166 = scmp.lt.s32.totalorder %s14, 1
      %s167 = scalar_select %p166, %s14, 1
      %s168 = smul.addr %s167, 2
      %s169 = smul.addr %s168, 8
      %s170 = scalar_lea.vmem %s3, %s169
      %v171 = vld [vmem:[%s165] sm:$0xff]
      %v172 = vld [vmem:[%s165 + $0x8] sm:$0xff]
      %v173 = vld [vmem:[%s1] sm:$0xff]
      %175 = vset.pattern.permute.xlu0 0
      %176 = vperm.xlu0 %175, %v173
      %v177 = vpop.permute.xlu0 %176
      %v179 = vmul.f32 %v171, %v177
      %v180 = vmul.f32 %v172, %v177
      %v181 = vld [vmem:[%s2] sm:$0xff]
      %183 = vset.pattern.permute.xlu0 0
      %184 = vperm.xlu0 %183, %v181
      %v185 = vpop.permute.xlu0 %184
      %v187 = vadd.f32 %v179, %v185
      %v188 = vadd.f32 %v180, %v185
      %189 = vst [vmem:[%s170] sm:$0xff] %v187
      %190 = vst [vmem:[%s170 + $0x8] sm:$0xff] %v188
      %p191 = scmp.lt.s32.totalorder %s14, 1
      %s192 = scalar_select %p191, %s14, 1
      %s193 = smul.addr %s192, 2
      %s194 = smul.addr %s193, 8
      %s195 = scalar_lea.vmem %s3, %s194
      // Predicated region
      $region33: #{unet_block_forward.3} parent=31 // pred_check
        %p196 = pneg %p100
      $region34: #{unet_block_forward.3} parent=31 // pred_check_branch
        %198 = sbr.rel (%p196) target = $region36
      $region35: #{unet_block_forward.3} parent=31 // pred_region
        _
      $region36: #{unet_block_forward.3} parent=31 // pred_fallthru
        _
    $region32: #{unet_block_forward.3} parent=5 // pred_fallthru
      _
    %p199 = scmp.le.s32.totalorder 2, %s9
    // Predicated region
    $region37: #{unet_block_forward.3} parent=5 // pred_check
      %p200 = pneg %p199
    $region38: #{unet_block_forward.3} parent=5 // pred_check_branch
      %202 = sbr.rel (%p200) target = $region40
    $region39: #{unet_block_forward.3} parent=5 // pred_region
      %s203 = ssub.s32 %s9, 2
      // Predicated region
      $region41: #{unet_block_forward.3} parent=39 // pred_check
        %p204 = pneg %p106
      $region42: #{unet_block_forward.3} parent=39 // pred_check_branch
        %206 = sbr.rel (%p204) target = $region44
      $region43: #{unet_block_forward.3} parent=39 // pred_region
        %p207 = scmp.lt.s32.totalorder %s15, 1
        %s208 = scalar_select %p207, %s15, 1
        %s209 = smul.addr %s208, 2
        %s210 = smul.addr %s209, 8
        %s211 = scalar_lea.vmem %s3, %s210
      $region44: #{unet_block_forward.3} parent=39 // pred_fallthru
        _
    $region40: #{unet_block_forward.3} parent=5 // pred_fallthru
      _
  $region6: #{unet_block_forward.3} parent=0 // loop_footer
    %s13 = sadd.s32 1, %s9
  $region7: #{unet_block_forward.3} parent=0 // loop_footer_branch
    %8 = sbr.rel target = $region3
  $region8: #{unet_block_forward.3} parent=0 // loop_exit
    _

// kernel: unet_block_forward.2
$region0: #{unet_block_forward.2}
  #allocation0 [shape = 'u32[]', space=smem, size = 0x4, offset = 0x4, fixed_abs, tag = 'smem constant byte address 0x4 - core index']
  #allocation1 [shape = 'u32[144,128]{1,0:T(1,128)}', space=vmem, size = 0x12000, scoped, tag = 'internal scratch']
  %s0 = inlined_call_operand.vmem [shape: f32[2,8,256], index: 0, kind: input, shape index: {}]
  %s1 = inlined_call_operand.vmem [shape: f32[2,8,256], index: 1, kind: input, shape index: {}]
  %s2 = inlined_call_operand.vmem [shape: f32[32,8], index: 2, kind: input, shape index: {}]
  %s3 = inlined_call_operand.vmem [shape: f32[8,1], index: 3, kind: input, shape index: {}]
  %s4 = inlined_call_operand.vmem [shape: f32[4,256], index: 4, kind: input, shape index: {}]
  %s5 = inlined_call_operand.vmem [shape: f32[8,144], index: 5, kind: input, shape index: {}]
  %s6 = inlined_call_operand.vmem [shape: f32[8,1], index: 6, kind: input, shape index: {}]
  %s7 = inlined_call_operand.vmem [shape: f32[8,72], index: 7, kind: input, shape index: {}]
  %s8 = inlined_call_operand.vmem [shape: f32[8,1], index: 8, kind: input, shape index: {}]
  %s9 = inlined_call_operand.vmem [shape: f32[9,256], index: 9, kind: input, shape index: {}]
  %s10 = inlined_call_operand.vmem [shape: f32[2,8,256], index: 10, kind: output, shape index: {0}]
  %s11 = inlined_call_operand.vmem [shape: f32[2,8,1], index: 11, kind: output, shape index: {1}]
  %s12 = inlined_call_operand.vmem [shape: f32[2,8,1], index: 12, kind: output, shape index: {2}]
  %13 = xla_tuple %s10, %s11, %s12
  %s14 = sld [smem:[#allocation0]]
  $region89: #{unet_block_forward.2} parent=0
    _
  %s16 = ssub.s32 1, %s14
  %s17 = scalar_select 0, %s16, %s14
  loop: start=0, step=1, limit=4
  $region2: #{unet_block_forward.2} parent=0 // loop_pre_header
    _
  $region3: #{unet_block_forward.2} parent=0 // loop_header
    %s19 = sphi 0, %s23
    %p20 = scmp.ge.s32.totalorder %s19, 4
    %s29 = sphi 0, %s31
    %s32 = sphi 0, %s29
    %s33 = sphi 0, %s32
    %s49 = sphi 0, %s33
    %s55 = sphi 0, %s57
    %s58 = sphi 0, %s55
    %s59 = sphi 0, %s58
    %s75 = sphi 0, %s59
    %s79 = sphi 0, %s79
    %s81 = sphi 0, %s79
    %s82 = sphi 0, %s81
    %s96 = sphi 0, %s82
    %s100 = sphi 0, %s100
    %s102 = sphi 0, %s100
    %s103 = sphi 0, %s102
    %s117 = sphi 0, %s103
    %s121 = sphi 0, %s121
    %s123 = sphi 0, %s121
    %s124 = sphi 0, %s123
    %s138 = sphi 0, %s124
    %s142 = sphi 0, %s142
    %s144 = sphi 0, %s142
    %s145 = sphi 0, %s144
    %s159 = sphi 0, %s145
    %s163 = sphi 0, %s163
    %s165 = sphi 0, %s163
    %s166 = sphi 0, %s165
    %s180 = sphi 0, %s166
    %s184 = sphi 0, %s184
    %s186 = sphi 0, %s184
    %s187 = sphi 0, %s186
    %s201 = sphi 0, %s187
    %s205 = sphi 0, %s205
    %s207 = sphi 0, %s205
    %s208 = sphi 0, %s207
    %s222 = sphi 0, %s208
    %s226 = sphi 0, %s226
    %s228 = sphi 0, %s226
    %s229 = sphi 0, %s228
    %s243 = sphi 0, %s229
    %s249 = sphi 0, %s251
    %s252 = sphi 0, %s249
    %s253 = sphi 0, %s252
    %s269 = sphi 0, %s253
    %s275 = sphi 0, %s277
    %s278 = sphi 0, %s275
    %s279 = sphi 0, %s278
    %s295 = sphi 0, %s279
    %s301 = sphi 0, %s303
    %s304 = sphi 0, %s301
    %s305 = sphi 0, %s304
    %s321 = sphi 0, %s305
  $region4: #{unet_block_forward.2} parent=0 // loop_header_branch
    %22 = sbr.rel (%p20) target = $region8
  $region5: #{unet_block_forward.2} parent=0 // loop_body
    %s24 = ssub.s32 %s19, 1
    %s25 = ssub.s32 %s19, 2
    %s26 = sadd.s32 %s19, 1
    %s27 = ssub.s32 %s19, %s26
    %p28 = scmp.eq.s32.totalorder %s27, 0
    %s30 = sadd.s32 %s29, 1
    %s31 = scalar_select %p28, %s29, %s30
    %p34 = pneg %p28
    %p35 = scmp.eq.s32.totalorder %s19, 1
    %p36 = por %p34, %p35
    %p37 = scmp.ne.s32.totalorder %s29, %s32
    %p38 = scmp.eq.s32.totalorder %s19, 0
    %p39 = por %p37, %p38
    %p40 = scmp.ne.s32.totalorder %s29, %s32
    %p41 = scmp.eq.s32.totalorder %s24, 1
    %p42 = por %p40, %p41
    %p43 = scmp.ne.s32.totalorder %s32, %s33
    %p44 = scmp.eq.s32.totalorder %s24, 0
    %p45 = por %p43, %p44
    %p46 = scmp.ne.s32.totalorder %s32, %s33
    %p47 = scmp.eq.s32.totalorder %s25, 1
    %p48 = por %p46, %p47
    %p50 = scmp.ne.s32.totalorder %s33, %s49
    %p51 = scmp.eq.s32.totalorder %s25, 0
    %p52 = por %p50, %p51
    %s53 = ssub.s32 %s19, %s26
    %p54 = scmp.eq.s32.totalorder %s53, 0
    %s56 = sadd.s32 %s55, 1
    %s57 = scalar_select %p54, %s55, %s56
    %p60 = pneg %p54
    %p61 = scmp.eq.s32.totalorder %s19, 1
    %p62 = por %p60, %p61
    %p63 = scmp.ne.s32.totalorder %s55, %s58
    %p64 = scmp.eq.s32.totalorder %s19, 0
    %p65 = por %p63, %p64
    %p66 = scmp.ne.s32.totalorder %s55, %s58
    %p67 = scmp.eq.s32.totalorder %s24, 1
    %p68 = por %p66, %p67
    %p69 = scmp.ne.s32.totalorder %s58, %s59
    %p70 = scmp.eq.s32.totalorder %s24, 0
    %p71 = por %p69, %p70
    %p72 = scmp.ne.s32.totalorder %s58, %s59
    %p73 = scmp.eq.s32.totalorder %s25, 1
    %p74 = por %p72, %p73
    %p76 = scmp.ne.s32.totalorder %s59, %s75
    %p77 = scmp.eq.s32.totalorder %s25, 0
    %p78 = por %p76, %p77
    %s80 = sadd.s32 %s79, 1
    %p83 = scmp.eq.s32.totalorder %s19, 1
    %p84 = scmp.ne.s32.totalorder %s79, %s81
    %p85 = scmp.eq.s32.totalorder %s19, 0
    %p86 = por %p84, %p85
    %p87 = scmp.ne.s32.totalorder %s79, %s81
    %p88 = scmp.eq.s32.totalorder %s24, 1
    %p89 = por %p87, %p88
    %p90 = scmp.ne.s32.totalorder %s81, %s82
    %p91 = scmp.eq.s32.totalorder %s24, 0
    %p92 = por %p90, %p91
    %p93 = scmp.ne.s32.totalorder %s81, %s82
    %p94 = scmp.eq.s32.totalorder %s25, 1
    %p95 = por %p93, %p94
    %p97 = scmp.ne.s32.totalorder %s82, %s96
    %p98 = scmp.eq.s32.totalorder %s25, 0
    %p99 = por %p97, %p98
    %s101 = sadd.s32 %s100, 1
    %p104 = scmp.eq.s32.totalorder %s19, 1
    %p105 = scmp.ne.s32.totalorder %s100, %s102
    %p106 = scmp.eq.s32.totalorder %s19, 0
    %p107 = por %p105, %p106
    %p108 = scmp.ne.s32.totalorder %s100, %s102
    %p109 = scmp.eq.s32.totalorder %s24, 1
    %p110 = por %p108, %p109
    %p111 = scmp.ne.s32.totalorder %s102, %s103
    %p112 = scmp.eq.s32.totalorder %s24, 0
    %p113 = por %p111, %p112
    %p114 = scmp.ne.s32.totalorder %s102, %s103
    %p115 = scmp.eq.s32.totalorder %s25, 1
    %p116 = por %p114, %p115
    %p118 = scmp.ne.s32.totalorder %s103, %s117
    %p119 = scmp.eq.s32.totalorder %s25, 0
    %p120 = por %p118, %p119
    %s122 = sadd.s32 %s121, 1
    %p125 = scmp.eq.s32.totalorder %s19, 1
    %p126 = scmp.ne.s32.totalorder %s121, %s123
    %p127 = scmp.eq.s32.totalorder %s19, 0
    %p128 = por %p126, %p127
    %p129 = scmp.ne.s32.totalorder %s121, %s123
    %p130 = scmp.eq.s32.totalorder %s24, 1
    %p131 = por %p129, %p130
    %p132 = scmp.ne.s32.totalorder %s123, %s124
    %p133 = scmp.eq.s32.totalorder %s24, 0
    %p134 = por %p132, %p133
    %p135 = scmp.ne.s32.totalorder %s123, %s124
    %p136 = scmp.eq.s32.totalorder %s25, 1
    %p137 = por %p135, %p136
    %p139 = scmp.ne.s32.totalorder %s124, %s138
    %p140 = scmp.eq.s32.totalorder %s25, 0
    %p141 = por %p139, %p140
    %s143 = sadd.s32 %s142, 1
    %p146 = scmp.eq.s32.totalorder %s19, 1
    %p147 = scmp.ne.s32.totalorder %s142, %s144
    %p148 = scmp.eq.s32.totalorder %s19, 0
    %p149 = por %p147, %p148
    %p150 = scmp.ne.s32.totalorder %s142, %s144
    %p151 = scmp.eq.s32.totalorder %s24, 1
    %p152 = por %p150, %p151
    %p153 = scmp.ne.s32.totalorder %s144, %s145
    %p154 = scmp.eq.s32.totalorder %s24, 0
    %p155 = por %p153, %p154
    %p156 = scmp.ne.s32.totalorder %s144, %s145
    %p157 = scmp.eq.s32.totalorder %s25, 1
    %p158 = por %p156, %p157
    %p160 = scmp.ne.s32.totalorder %s145, %s159
    %p161 = scmp.eq.s32.totalorder %s25, 0
    %p162 = por %p160, %p161
    %s164 = sadd.s32 %s163, 1
    %p167 = scmp.eq.s32.totalorder %s19, 1
    %p168 = scmp.ne.s32.totalorder %s163, %s165
    %p169 = scmp.eq.s32.totalorder %s19, 0
    %p170 = por %p168, %p169
    %p171 = scmp.ne.s32.totalorder %s163, %s165
    %p172 = scmp.eq.s32.totalorder %s24, 1
    %p173 = por %p171, %p172
    %p174 = scmp.ne.s32.totalorder %s165, %s166
    %p175 = scmp.eq.s32.totalorder %s24, 0
    %p176 = por %p174, %p175
    %p177 = scmp.ne.s32.totalorder %s165, %s166
    %p178 = scmp.eq.s32.totalorder %s25, 1
    %p179 = por %p177, %p178
    %p181 = scmp.ne.s32.totalorder %s166, %s180
    %p182 = scmp.eq.s32.totalorder %s25, 0
    %p183 = por %p181, %p182
    %s185 = sadd.s32 %s184, 1
    %p188 = scmp.eq.s32.totalorder %s19, 1
    %p189 = scmp.ne.s32.totalorder %s184, %s186
    %p190 = scmp.eq.s32.totalorder %s19, 0
    %p191 = por %p189, %p190
    %p192 = scmp.ne.s32.totalorder %s184, %s186
    %p193 = scmp.eq.s32.totalorder %s24, 1
    %p194 = por %p192, %p193
    %p195 = scmp.ne.s32.totalorder %s186, %s187
    %p196 = scmp.eq.s32.totalorder %s24, 0
    %p197 = por %p195, %p196
    %p198 = scmp.ne.s32.totalorder %s186, %s187
    %p199 = scmp.eq.s32.totalorder %s25, 1
    %p200 = por %p198, %p199
    %p202 = scmp.ne.s32.totalorder %s187, %s201
    %p203 = scmp.eq.s32.totalorder %s25, 0
    %p204 = por %p202, %p203
    %s206 = sadd.s32 %s205, 1
    %p209 = scmp.eq.s32.totalorder %s19, 1
    %p210 = scmp.ne.s32.totalorder %s205, %s207
    %p211 = scmp.eq.s32.totalorder %s19, 0
    %p212 = por %p210, %p211
    %p213 = scmp.ne.s32.totalorder %s205, %s207
    %p214 = scmp.eq.s32.totalorder %s24, 1
    %p215 = por %p213, %p214
    %p216 = scmp.ne.s32.totalorder %s207, %s208
    %p217 = scmp.eq.s32.totalorder %s24, 0
    %p218 = por %p216, %p217
    %p219 = scmp.ne.s32.totalorder %s207, %s208
    %p220 = scmp.eq.s32.totalorder %s25, 1
    %p221 = por %p219, %p220
    %p223 = scmp.ne.s32.totalorder %s208, %s222
    %p224 = scmp.eq.s32.totalorder %s25, 0
    %p225 = por %p223, %p224
    %s227 = sadd.s32 %s226, 1
    %p230 = scmp.eq.s32.totalorder %s19, 1
    %p231 = scmp.ne.s32.totalorder %s226, %s228
    %p232 = scmp.eq.s32.totalorder %s19, 0
    %p233 = por %p231, %p232
    %p234 = scmp.ne.s32.totalorder %s226, %s228
    %p235 = scmp.eq.s32.totalorder %s24, 1
    %p236 = por %p234, %p235
    %p237 = scmp.ne.s32.totalorder %s228, %s229
    %p238 = scmp.eq.s32.totalorder %s24, 0
    %p239 = por %p237, %p238
    %p240 = scmp.ne.s32.totalorder %s228, %s229
    %p241 = scmp.eq.s32.totalorder %s25, 1
    %p242 = por %p240, %p241
    %p244 = scmp.ne.s32.totalorder %s229, %s243
    %p245 = scmp.eq.s32.totalorder %s25, 0
    %p246 = por %p244, %p245
    %s247 = ssub.s32 %s19, %s26
    %p248 = scmp.eq.s32.totalorder %s247, 0
    %s250 = sadd.s32 %s249, 1
    %s251 = scalar_select %p248, %s249, %s250
    %p254 = pneg %p248
    %p255 = scmp.eq.s32.totalorder %s19, 1
    %p256 = por %p254, %p255
    %p257 = scmp.ne.s32.totalorder %s249, %s252
    %p258 = scmp.eq.s32.totalorder %s19, 0
    %p259 = por %p257, %p258
    %p260 = scmp.ne.s32.totalorder %s249, %s252
    %p261 = scmp.eq.s32.totalorder %s24, 1
    %p262 = por %p260, %p261
    %p263 = scmp.ne.s32.totalorder %s252, %s253
    %p264 = scmp.eq.s32.totalorder %s24, 0
    %p265 = por %p263, %p264
    %p266 = scmp.ne.s32.totalorder %s252, %s253
    %p267 = scmp.eq.s32.totalorder %s25, 1
    %p268 = por %p266, %p267
    %p270 = scmp.ne.s32.totalorder %s253, %s269
    %p271 = scmp.eq.s32.totalorder %s25, 0
    %p272 = por %p270, %p271
    %s273 = ssub.s32 %s19, %s26
    %p274 = scmp.eq.s32.totalorder %s273, 0
    %s276 = sadd.s32 %s275, 1
    %s277 = scalar_select %p274, %s275, %s276
    %p280 = pneg %p274
    %p281 = scmp.eq.s32.totalorder %s19, 1
    %p282 = por %p280, %p281
    %p283 = scmp.ne.s32.totalorder %s275, %s278
    %p284 = scmp.eq.s32.totalorder %s19, 0
    %p285 = por %p283, %p284
    %p286 = scmp.ne.s32.totalorder %s275, %s278
    %p287 = scmp.eq.s32.totalorder %s24, 1
    %p288 = por %p286, %p287
    %p289 = scmp.ne.s32.totalorder %s278, %s279
    %p290 = scmp.eq.s32.totalorder %s24, 0
    %p291 = por %p289, %p290
    %p292 = scmp.ne.s32.totalorder %s278, %s279
    %p293 = scmp.eq.s32.totalorder %s25, 1
    %p294 = por %p292, %p293
    %p296 = scmp.ne.s32.totalorder %s279, %s295
    %p297 = scmp.eq.s32.totalorder %s25, 0
    %p298 = por %p296, %p297
    %s299 = ssub.s32 %s19, %s26
    %p300 = scmp.eq.s32.totalorder %s299, 0
    %s302 = sadd.s32 %s301, 1
    %s303 = scalar_select %p300, %s301, %s302
    %p306 = pneg %p300
    %p307 = scmp.eq.s32.totalorder %s19, 1
    %p308 = por %p306, %p307
    %p309 = scmp.ne.s32.totalorder %s301, %s304
    %p310 = scmp.eq.s32.totalorder %s19, 0
    %p311 = por %p309, %p310
    %p312 = scmp.ne.s32.totalorder %s301, %s304
    %p313 = scmp.eq.s32.totalorder %s24, 1
    %p314 = por %p312, %p313
    %p315 = scmp.ne.s32.totalorder %s304, %s305
    %p316 = scmp.eq.s32.totalorder %s24, 0
    %p317 = por %p315, %p316
    %p318 = scmp.ne.s32.totalorder %s304, %s305
    %p319 = scmp.eq.s32.totalorder %s25, 1
    %p320 = por %p318, %p319
    %p322 = scmp.ne.s32.totalorder %s305, %s321
    %p323 = scmp.eq.s32.totalorder %s25, 0
    %p324 = por %p322, %p323
    %p325 = scmp.le.s32.totalorder 1, %s19
    %p326 = scmp.lt.s32.totalorder %s19, 3
    %p327 = pnand %p325, %p326
    %p328 = pneg %p327
    // Predicated region
    $region9: #{unet_block_forward.2} parent=5 // pred_check
      _
    $region10: #{unet_block_forward.2} parent=5 // pred_check_branch
      %330 = sbr.rel (%p327) target = $region12
    $region11: #{unet_block_forward.2} parent=5 // pred_region
      %s331 = ssub.s32 %s19, 1
      // Predicated region
      $region13: #{unet_block_forward.2} parent=11 // pred_check
        %p332 = pneg %p92
      $region14: #{unet_block_forward.2} parent=11 // pred_check_branch
        %334 = sbr.rel (%p332) target = $region16
      $region15: #{unet_block_forward.2} parent=11 // pred_region
        _
      $region16: #{unet_block_forward.2} parent=11 // pred_fallthru
        _
      // Predicated region
      $region17: #{unet_block_forward.2} parent=11 // pred_check
        %p335 = pneg %p113
      $region18: #{unet_block_forward.2} parent=11 // pred_check_branch
        %337 = sbr.rel (%p335) target = $region20
      $region19: #{unet_block_forward.2} parent=11 // pred_region
        _
      $region20: #{unet_block_forward.2} parent=11 // pred_fallthru
        _
      // Predicated region
      $region21: #{unet_block_forward.2} parent=11 // pred_check
        %p338 = pneg %p134
      $region22: #{unet_block_forward.2} parent=11 // pred_check_branch
        %340 = sbr.rel (%p338) target = $region24
      $region23: #{unet_block_forward.2} parent=11 // pred_region
        _
      $region24: #{unet_block_forward.2} parent=11 // pred_fallthru
        _
      // Predicated region
      $region25: #{unet_block_forward.2} parent=11 // pred_check
        %p341 = pneg %p155
      $region26: #{unet_block_forward.2} parent=11 // pred_check_branch
        %343 = sbr.rel (%p341) target = $region28
      $region27: #{unet_block_forward.2} parent=11 // pred_region
        _
      $region28: #{unet_block_forward.2} parent=11 // pred_fallthru
        _
      // Predicated region
      $region29: #{unet_block_forward.2} parent=11 // pred_check
        %p344 = pneg %p176
      $region30: #{unet_block_forward.2} parent=11 // pred_check_branch
        %346 = sbr.rel (%p344) target = $region32
      $region31: #{unet_block_forward.2} parent=11 // pred_region
        _
      $region32: #{unet_block_forward.2} parent=11 // pred_fallthru
        _
      // Predicated region
      $region33: #{unet_block_forward.2} parent=11 // pred_check
        %p347 = pneg %p197
      $region34: #{unet_block_forward.2} parent=11 // pred_check_branch
        %349 = sbr.rel (%p347) target = $region36
      $region35: #{unet_block_forward.2} parent=11 // pred_region
        _
      $region36: #{unet_block_forward.2} parent=11 // pred_fallthru
        _
      // Predicated region
      $region37: #{unet_block_forward.2} parent=11 // pred_check
        %p350 = pneg %p218
      $region38: #{unet_block_forward.2} parent=11 // pred_check_branch
        %352 = sbr.rel (%p350) target = $region40
      $region39: #{unet_block_forward.2} parent=11 // pred_region
        _
      $region40: #{unet_block_forward.2} parent=11 // pred_fallthru
        _
      // Predicated region
      $region41: #{unet_block_forward.2} parent=11 // pred_check
        %p353 = pneg %p239
      $region42: #{unet_block_forward.2} parent=11 // pred_check_branch
        %355 = sbr.rel (%p353) target = $region44
      $region43: #{unet_block_forward.2} parent=11 // pred_region
        _
      $region44: #{unet_block_forward.2} parent=11 // pred_fallthru
        _
    $region12: #{unet_block_forward.2} parent=5 // pred_fallthru
      _
    %p356 = scmp.lt.s32.totalorder %s19, 2
    // Predicated region
    $region45: #{unet_block_forward.2} parent=5 // pred_check
      %p357 = pneg %p356
    $region46: #{unet_block_forward.2} parent=5 // pred_check_branch
      %359 = sbr.rel (%p357) target = $region48
    $region47: #{unet_block_forward.2} parent=5 // pred_region
      // Predicated region
      $region49: #{unet_block_forward.2} parent=47 // pred_check
        %p360 = pneg %p39
      $region50: #{unet_block_forward.2} parent=47 // pred_check_branch
        %362 = sbr.rel (%p360) target = $region52
      $region51: #{unet_block_forward.2} parent=47 // pred_region
        %p363 = scmp.lt.s32.totalorder %s19, 1
        %s364 = scalar_select %p363, %s19, 1
        %s365 = smul.addr %s364, 2
        %s366 = smul.addr %s365, 8
        %s367 = scalar_lea.vmem %s0, %s366
      $region52: #{unet_block_forward.2} parent=47 // pred_fallthru
        _
      // Predicated region
      $region53: #{unet_block_forward.2} parent=47 // pred_check
        %p368 = pneg %p65
      $region54: #{unet_block_forward.2} parent=47 // pred_check_branch
        %370 = sbr.rel (%p368) target = $region56
      $region55: #{unet_block_forward.2} parent=47 // pred_region
        %p371 = scmp.lt.s32.totalorder %s19, 1
        %s372 = scalar_select %p371, %s19, 1
        %s373 = smul.addr %s372, 2
        %s374 = smul.addr %s373, 8
        %s375 = scalar_lea.vmem %s1, %s374
      $region56: #{unet_block_forward.2} parent=47 // pred_fallthru
        _
    $region48: #{unet_block_forward.2} parent=5 // pred_fallthru
      _
    %p376 = scmp.le.s32.totalorder 1, %s19
    %p377 = scmp.lt.s32.totalorder %s19, 3
    %p378 = pnand %p376, %p377
    %p379 = pneg %p378
    // Predicated region
    $region57: #{unet_block_forward.2} parent=5 // pred_check
      _
    $region58: #{unet_block_forward.2} parent=5 // pred_check_branch
      %381 = sbr.rel (%p378) target = $region60
    $region59: #{unet_block_forward.2} parent=5 // pred_region
      %s382 = ssub.s32 %s19, 1
      %p383 = scmp.lt.s32.totalorder %s24, 1
      %s384 = scalar_select %p383, %s24, 1
      %s385 = smul.addr %s384, 2
      %s386 = smul.addr %s385, 8
      %s387 = scalar_lea.vmem %s0, %s386
      %p388 = pneg %p45
      %p389 = pneg %p42
      %p390 = scmp.lt.s32.totalorder %s24, 1
      %s391 = scalar_select %p390, %s24, 1
      %s392 = smul.addr %s391, 2
      %s393 = smul.addr %s392, 8
      %s394 = scalar_lea.vmem %s1, %s393
      %p395 = pneg %p71
      %p396 = pneg %p68
      %p397 = pneg %p92
      %p398 = pneg %p89
      %p399 = pneg %p113
      %p400 = pneg %p110
      %p401 = pneg %p134
      %p402 = pneg %p131
      %p403 = pneg %p155
      %p404 = pneg %p152
      %p405 = pneg %p176
      %p406 = pneg %p173
      %p407 = pneg %p197
      %p408 = pneg %p194
      %p409 = pneg %p218
      %p410 = pneg %p215
      %p411 = pneg %p239
      %p412 = pneg %p236
      %p413 = pneg %p265
      %p414 = pneg %p262
      %p415 = scmp.lt.s32.totalorder %s24, 1
      %s416 = scalar_select %p415, %s24, 1
      %s417 = smul.addr %s416, 2
      %s418 = smul.addr %s417, 8
      %s419 = scalar_lea.vmem %s10, %s418
      %p420 = pneg %p291
      %p421 = pneg %p288
      %p422 = scmp.lt.s32.totalorder %s24, 1
      %s423 = scalar_select %p422, %s24, 1
      %s424 = smul.addr %s423, 8
      %s425 = scalar_lea.vmem %s11, %s424
      %p426 = pneg %p317
      %p427 = pneg %p314
      %p428 = scmp.lt.s32.totalorder %s24, 1
      %s429 = scalar_select %p428, %s24, 1
      %s430 = smul.addr %s429, 8
      %s431 = scalar_lea.vmem %s12, %s430
      %p432 = scmp.lt.s32.totalorder %s24, 1
      %s433 = scalar_select %p432, %s24, 1
      %s434 = smul.addr %s433, 2
      %s435 = smul.addr %s434, 8
      %s436 = scalar_lea.vmem %s0, %s435
      %p437 = scmp.lt.s32.totalorder %s24, 1
      %s438 = scalar_select %p437, %s24, 1
      %s439 = smul.addr %s438, 2
      %s440 = smul.addr %s439, 8
      %s441 = scalar_lea.vmem %s1, %s440
      %p442 = scmp.lt.s32.totalorder %s24, 1
      %s443 = scalar_select %p442, %s24, 1
      %s444 = smul.addr %s443, 2
      %s445 = smul.addr %s444, 8
      %s446 = scalar_lea.vmem %s10, %s445
      %p447 = scmp.lt.s32.totalorder %s24, 1
      %s448 = scalar_select %p447, %s24, 1
      %s449 = smul.addr %s448, 8
      %s450 = scalar_lea.vmem %s11, %s449
      %p451 = scmp.lt.s32.totalorder %s24, 1
      %s452 = scalar_select %p451, %s24, 1
      %s453 = smul.addr %s452, 8
      %s454 = scalar_lea.vmem %s12, %s453
      %v455 = vld [vmem:[%s2] sm:$0xff]
      %v456 = vld [vmem:[%s2 + $0x8] sm:$0xff]
      %v457 = vld [vmem:[%s2 + $0x10] sm:$0xff]
      %v458 = vld [vmem:[%s2 + $0x18] sm:$0xff]
      %v459 = vld [vmem:[%s436] sm:$0xff]
      %v460 = vld [vmem:[%s436 + $0x8] sm:$0xff]
      %vm461 = vcmask 64512
      %v463 = vsel %vm461, %v455, 0
      %v466 = vsel %vm461, %v456, 0
      %v469 = vsel %vm461, %v457, 0
      %v472 = vsel %vm461, %v458, 0
      %474 = vmatprep.subr.mxu0 0.0
      %475 = vmatpush1.msra.mxu0 0.0
      %476 = vmatprep.subr.mxu0 0.0
      %477 = vmatpush1.msra.mxu0 0.0
      %478 = vmatprep.subr.mxu0 0.0
      %479 = vmatpush1.msra.mxu0 0.0
      %480 = vmatprep.subr.mxu0 0.0
      %481 = vmatpush1.msra.mxu0 0.0
      %482 = vmatprep.subr.mxu0 0.0
      %483 = vmatpush1.msra.mxu0 0.0
      %484 = vmatprep.subr.mxu0 0.0
      %485 = vmatpush1.msra.mxu0 0.0
      %486 = vmatprep.subr.mxu0 0.0
      %487 = vmatpush1.msra.mxu0 0.0
      %488 = vmatprep.subr.mxu0 0.0
      %489 = vmatpush1.msra.mxu0 0.0
      %490 = vmatprep.subr.mxu0 0.0
      %491 = vmatpush1.msra.mxu0 0.0
      %492 = vmatprep.subr.mxu0 0.0
      %493 = vmatpush1.msra.mxu0 0.0
      %494 = vmatprep.subr.mxu0 0.0
      %495 = vmatpush1.msra.mxu0 0.0
      %496 = vmatprep.subr.mxu0 0.0
      %497 = vmatpush1.msra.mxu0 0.0
      %498 = vmatprep.subr.mxu0 0.0
      %499 = vmatpush1.msra.mxu0 0.0
      %500 = vmatprep.subr.mxu0 0.0
      %501 = vmatpush1.msra.mxu0 0.0
      %502 = vmatprep.subr.mxu0 0.0
      %503 = vmatpush1.msra.mxu0 0.0
      %504 = vmatprep.subr.mxu0 %v460
      %505 = vmatpush1.msra.mxu0 %v459
      %506 = vmatprep.subr.mxu0 0.0
      %507 = vmatpush2.msra.mxu0 0.0
      %508 = vmatprep.subr.mxu0 0.0
      %509 = vmatpush2.msra.mxu0 0.0
      %510 = vmatprep.subr.mxu0 0.0
      %511 = vmatpush2.msra.mxu0 0.0
      %512 = vmatprep.subr.mxu0 0.0
      %513 = vmatpush2.msra.mxu0 0.0
      %514 = vmatprep.subr.mxu0 0.0
      %515 = vmatpush2.msra.mxu0 0.0
      %516 = vmatprep.subr.mxu0 0.0
      %517 = vmatpush2.msra.mxu0 0.0
      %518 = vmatprep.subr.mxu0 0.0
      %519 = vmatpush2.msra.mxu0 0.0
      %520 = vmatprep.subr.mxu0 0.0
      %521 = vmatpush2.msra.mxu0 0.0
      %522 = vmatprep.subr.mxu0 0.0
      %523 = vmatpush2.msra.mxu0 0.0
      %524 = vmatprep.subr.mxu0 0.0
      %525 = vmatpush2.msra.mxu0 0.0
      %526 = vmatprep.subr.mxu0 0.0
      %527 = vmatpush2.msra.mxu0 0.0
      %528 = vmatprep.subr.mxu0 0.0
      %529 = vmatpush2.msra.mxu0 0.0
      %530 = vmatprep.subr.mxu0 0.0
      %531 = vmatpush2.msra.mxu0 0.0
      %532 = vmatprep.subr.mxu0 0.0
      %533 = vmatpush2.msra.mxu0 0.0
      %534 = vmatprep.subr.mxu0 0.0
      %535 = vmatpush2.msra.mxu0 0.0
      %536 = vmatprep.subr.mxu0 0.0
      %537 = vmatpush2.msra.mxu0 0.0
      %538 = vmatprep.mubr.f32.mxu0 0.0
      %539 = vmatmul.mubr.f32.gmra.mxu0 %v463
      %v540 = vpop.f32.mrf.mxu0
      %v541 = vadd.f32 0.0, %v540
      %v542 = vpop.f32.mrf.mxu0
      %v543 = vadd.f32 0.0, %v542
      %544 = vmatprep.mubr.f32.mxu0 0.0
      %545 = vmatmul.mubr.f32.gmra.mxu0 %v466
      %v546 = vpop.f32.mrf.mxu0
      %v547 = vadd.f32 0.0, %v546
      %v548 = vpop.f32.mrf.mxu0
      %v549 = vadd.f32 0.0, %v548
      %550 = vmatprep.mubr.f32.mxu0 0.0
      %551 = vmatmul.mubr.f32.gmra.mxu0 %v469
      %v552 = vpop.f32.mrf.mxu0
      %v553 = vadd.f32 0.0, %v552
      %v554 = vpop.f32.mrf.mxu0
      %v555 = vadd.f32 0.0, %v554
      %556 = vmatprep.mubr.f32.mxu0 0.0
      %557 = vmatmul.mubr.f32.gmra.mxu0 %v472
      %v558 = vpop.f32.mrf.mxu0
      %v559 = vadd.f32 0.0, %v558
      %v560 = vpop.f32.mrf.mxu0
      %v561 = vadd.f32 0.0, %v560
      %562 = vdwg.mxu0
      %v563 = vld [vmem:[%s4] sm:$0xff]
      %v565 = vlaneseq
      %v566 = vshrl.u32 %v565, 7
      %v567 = vsub.s32 0, %v566
      %v568 = vrot.slane %v563, %v567
      %v569 = vlaneseq
      %v570 = vshrl.u32 %v569, 7
      %v571 = vsub.s32 4, %v570
      %v572 = vrot.slane %v563, %v571
      %v575 = vlaneseq
      %v576 = vshrl.u32 %v575, 7
      %v577 = vsub.s32 0, %v576
      %v578 = vrot.slane %v568, %v577
      %v579 = vlaneseq
      %v580 = vshrl.u32 %v579, 7
      %v581 = vsub.s32 0, %v580
      %v582 = vrot.slane %v572, %v581
      %v583 = vmul.f32 %v541, %v578
      %v584 = vmul.f32 %v543, %v582
      %v585 = vlaneseq
      %v586 = vshrl.u32 %v585, 7
      %v587 = vsub.s32 1, %v586
      %v588 = vrot.slane %v563, %v587
      %v589 = vlaneseq
      %v590 = vshrl.u32 %v589, 7
      %v591 = vsub.s32 5, %v590
      %v592 = vrot.slane %v563, %v591
      %v595 = vlaneseq
      %v596 = vshrl.u32 %v595, 7
      %v597 = vsub.s32 1, %v596
      %v598 = vrot.slane %v588, %v597
      %v599 = vlaneseq
      %v600 = vshrl.u32 %v599, 7
      %v601 = vsub.s32 1, %v600
      %v602 = vrot.slane %v592, %v601
      %v603 = vmul.f32 %v547, %v598
      %v604 = vmul.f32 %v549, %v602
      %v605 = vadd.f32 %v583, %v603
      %v606 = vadd.f32 %v584, %v604
      %v607 = vlaneseq
      %v608 = vshrl.u32 %v607, 7
      %v609 = vsub.s32 2, %v608
      %v610 = vrot.slane %v563, %v609
      %v611 = vlaneseq
      %v612 = vshrl.u32 %v611, 7
      %v613 = vsub.s32 6, %v612
      %v614 = vrot.slane %v563, %v613
      %v617 = vlaneseq
      %v618 = vshrl.u32 %v617, 7
      %v619 = vsub.s32 2, %v618
      %v620 = vrot.slane %v610, %v619
      %v621 = vlaneseq
      %v622 = vshrl.u32 %v621, 7
      %v623 = vsub.s32 2, %v622
      %v624 = vrot.slane %v614, %v623
      %v625 = vmul.f32 %v553, %v620
      %v626 = vmul.f32 %v555, %v624
      %v627 = vadd.f32 %v605, %v625
      %v628 = vadd.f32 %v606, %v626
      %v629 = vlaneseq
      %v630 = vshrl.u32 %v629, 7
      %v631 = vsub.s32 3, %v630
      %v632 = vrot.slane %v563, %v631
      %v633 = vlaneseq
      %v634 = vshrl.u32 %v633, 7
      %v635 = vsub.s32 7, %v634
      %v636 = vrot.slane %v563, %v635
      %v639 = vlaneseq
      %v640 = vshrl.u32 %v639, 7
      %v641 = vsub.s32 3, %v640
      %v642 = vrot.slane %v632, %v641
      %v643 = vlaneseq
      %v644 = vshrl.u32 %v643, 7
      %v645 = vsub.s32 3, %v644
      %v646 = vrot.slane %v636, %v645
      %v647 = vmul.f32 %v559, %v642
      %v648 = vmul.f32 %v561, %v646
      %v649 = vadd.f32 %v627, %v647
      %v650 = vadd.f32 %v628, %v648
      %v651 = vld [vmem:[%s3] sm:$0xff]
      %653 = vset.pattern.permute.xlu0 0
      %654 = vperm.xlu0 %653, %v651
      %v655 = vpop.permute.xlu0 %654
      %v657 = vadd.f32 %v649, %v655
      %v658 = vadd.f32 %v650, %v655
      %v659 = vld [vmem:[%s441] sm:$0xff]
      %v660 = vld [vmem:[%s441 + $0x8] sm:$0xff]
      %v661 = vld [vmem:[%s9] sm:$0xff]
      %v662 = vld [vmem:[%s9 + $0x8] sm:$0xff]
      %v663 = vld [vmem:[%s9 + $0x10] sm:$0x1]
      %v664 = vld [vmem:[%s9 + $0x18] sm:$0x1]
      %v665 = vld [vmem:[%s5] sm:$0xff]
      %v666 = vld [vmem:[%s5 + $0x8] sm:$0xff]
      %v667 = vld [vmem:[%s6] sm:$0xff]
      %668 = vrot.lane.b32.xlu0 %v657, 17
      %v669 = vpop.permute.xlu0 %668
      %670 = vrot.lane.b32.xlu0 %v659, 17
      %v671 = vpop.permute.xlu0 %670
      %672 = vrot.lane.b32.xlu0 %v658, 17
      %v673 = vpop.permute.xlu0 %672
      %674 = vrot.lane.b32.xlu0 %v660, 17
      %v675 = vpop.permute.xlu0 %674
      %v676 = vlaneseq
      %v677 = vand.u32 %v676, 127
      %vm678 = vcmp.lt.s32.totalorder %v677, 17
      %v679 = vsel %vm678, %v669, %v673
      %v680 = vsel %vm678, %v671, %v675
      %v681 = vsel %vm678, %v673, %v669
      %v682 = vsel %vm678, %v675, %v671
      %v683 = vlaneseq
      %v684 = vshrl.u32 %v683, 7
      %v685 = vsub.s32 0, %v684
      %v686 = vrot.slane %v661, %v685
      %v687 = vlaneseq
      %v688 = vshrl.u32 %v687, 7
      %v689 = vsub.s32 0, %v688
      %v690 = vrot.slane %v662, %v689
      %v691 = vmul.f32 %v681, %v686
      %v692 = vmul.f32 %v679, %v690
      %v693 = vmul.f32 %v682, %v686
      %v694 = vmul.f32 %v680, %v690
      %695 = vrot.lane.b32.xlu0 %v657, 16
      %v696 = vpop.permute.xlu0 %695
      %697 = vrot.lane.b32.xlu0 %v659, 16
      %v698 = vpop.permute.xlu0 %697
      %699 = vrot.lane.b32.xlu0 %v658, 16
      %v700 = vpop.permute.xlu0 %699
      %701 = vrot.lane.b32.xlu0 %v660, 16
      %v702 = vpop.permute.xlu0 %701
      %vm703 = vcmp.lt.s32.totalorder %v677, 16
      %v704 = vsel %vm703, %v696, %v700
      %v705 = vsel %vm703, %v698, %v702
      %v706 = vsel %vm703, %v700, %v696
      %v707 = vsel %vm703, %v702, %v698
      %v708 = vlaneseq
      %v709 = vshrl.u32 %v708, 7
      %v710 = vsub.s32 1, %v709
      %v711 = vrot.slane %v661, %v710
      %v712 = vlaneseq
      %v713 = vshrl.u32 %v712, 7
      %v714 = vsub.s32 1, %v713
      %v715 = vrot.slane %v662, %v714
      %v716 = vmul.f32 %v706, %v711
      %v717 = vmul.f32 %v704, %v715
      %v718 = vmul.f32 %v707, %v711
      %v719 = vmul.f32 %v705, %v715
      %720 = vrot.lane.b32.xlu0 %v657, 15
      %v721 = vpop.permute.xlu0 %720
      %722 = vrot.lane.b32.xlu0 %v659, 15
      %v723 = vpop.permute.xlu0 %722
      %724 = vrot.lane.b32.xlu0 %v658, 15
      %v725 = vpop.permute.xlu0 %724
      %726 = vrot.lane.b32.xlu0 %v660, 15
      %v727 = vpop.permute.xlu0 %726
      %vm728 = vcmp.lt.s32.totalorder %v677, 15
      %v729 = vsel %vm728, %v721, %v725
      %v730 = vsel %vm728, %v723, %v727
      %v731 = vsel %vm728, %v725, %v721
      %v732 = vsel %vm728, %v727, %v723
      %v733 = vlaneseq
      %v734 = vshrl.u32 %v733, 7
      %v735 = vsub.s32 2, %v734
      %v736 = vrot.slane %v661, %v735
      %v737 = vlaneseq
      %v738 = vshrl.u32 %v737, 7
      %v739 = vsub.s32 2, %v738
      %v740 = vrot.slane %v662, %v739
      %v741 = vmul.f32 %v731, %v736
      %v742 = vmul.f32 %v729, %v740
      %v743 = vmul.f32 %v732, %v736
      %v744 = vmul.f32 %v730, %v740
      %745 = vrot.lane.b32.xlu0 %v657, 1
      %v746 = vpop.permute.xlu0 %745
      %747 = vrot.lane.b32.xlu0 %v659, 1
      %v748 = vpop.permute.xlu0 %747
      %749 = vrot.lane.b32.xlu0 %v658, 1
      %v750 = vpop.permute.xlu0 %749
      %751 = vrot.lane.b32.xlu0 %v660, 1
      %v752 = vpop.permute.xlu0 %751
      %vm753 = vcmp.lt.s32.totalorder %v677, 1
      %v754 = vsel %vm753, %v746, %v750
      %v755 = vsel %vm753, %v748, %v752
      %v756 = vsel %vm753, %v750, %v746
      %v757 = vsel %vm753, %v752, %v748
      %v758 = vlaneseq
      %v759 = vshrl.u32 %v758, 7
      %v760 = vsub.s32 3, %v759
      %v761 = vrot.slane %v661, %v760
      %v762 = vlaneseq
      %v763 = vshrl.u32 %v762, 7
      %v764 = vsub.s32 3, %v763
      %v765 = vrot.slane %v662, %v764
      %v766 = vmul.f32 %v756, %v761
      %v767 = vmul.f32 %v754, %v765
      %v768 = vmul.f32 %v757, %v761
      %v769 = vmul.f32 %v755, %v765
      %770 = vrot.lane.b32.xlu0 %v657, 127
      %v771 = vpop.permute.xlu0 %770
      %772 = vrot.lane.b32.xlu0 %v659, 127
      %v773 = vpop.permute.xlu0 %772
      %774 = vrot.lane.b32.xlu0 %v658, 127
      %v775 = vpop.permute.xlu0 %774
      %776 = vrot.lane.b32.xlu0 %v660, 127
      %v777 = vpop.permute.xlu0 %776
      %vm778 = vcmp.lt.s32.totalorder %v677, 127
      %v779 = vsel %vm778, %v771, %v775
      %v780 = vsel %vm778, %v773, %v777
      %v781 = vsel %vm778, %v775, %v771
      %v782 = vsel %vm778, %v777, %v773
      %v783 = vlaneseq
      %v784 = vshrl.u32 %v783, 7
      %v785 = vsub.s32 5, %v784
      %v786 = vrot.slane %v661, %v785
      %v787 = vlaneseq
      %v788 = vshrl.u32 %v787, 7
      %v789 = vsub.s32 5, %v788
      %v790 = vrot.slane %v662, %v789
      %v791 = vmul.f32 %v779, %v786
      %v792 = vmul.f32 %v781, %v790
      %v793 = vmul.f32 %v780, %v786
      %v794 = vmul.f32 %v782, %v790
      %795 = vrot.lane.b32.xlu0 %v657, 113
      %v796 = vpop.permute.xlu0 %795
      %797 = vrot.lane.b32.xlu0 %v659, 113
      %v798 = vpop.permute.xlu0 %797
      %799 = vrot.lane.b32.xlu0 %v658, 113
      %v800 = vpop.permute.xlu0 %799
      %801 = vrot.lane.b32.xlu0 %v660, 113
      %v802 = vpop.permute.xlu0 %801
      %vm803 = vcmp.lt.s32.totalorder %v677, 113
      %v804 = vsel %vm803, %v796, %v800
      %v805 = vsel %vm803, %v798, %v802
      %v806 = vsel %vm803, %v800, %v796
      %v807 = vsel %vm803, %v802, %v798
      %v808 = vlaneseq
      %v809 = vshrl.u32 %v808, 7
      %v810 = vsub.s32 6, %v809
      %v811 = vrot.slane %v661, %v810
      %v812 = vlaneseq
      %v813 = vshrl.u32 %v812, 7
      %v814 = vsub.s32 6, %v813
      %v815 = vrot.slane %v662, %v814
      %v816 = vmul.f32 %v804, %v811
      %v817 = vmul.f32 %v806, %v815
      %v818 = vmul.f32 %v805, %v811
      %v819 = vmul.f32 %v807, %v815
      %820 = vrot.lane.b32.xlu0 %v657, 112
      %v821 = vpop.permute.xlu0 %820
      %822 = vrot.lane.b32.xlu0 %v659, 112
      %v823 = vpop.permute.xlu0 %822
      %824 = vrot.lane.b32.xlu0 %v658, 112
      %v825 = vpop.permute.xlu0 %824
      %826 = vrot.lane.b32.xlu0 %v660, 112
      %v827 = vpop.permute.xlu0 %826
      %vm828 = vcmp.lt.s32.totalorder %v677, 112
      %v829 = vsel %vm828, %v821, %v825
      %v830 = vsel %vm828, %v823, %v827
      %v831 = vsel %vm828, %v825, %v821
      %v832 = vsel %vm828, %v827, %v823
      %v833 = vlaneseq
      %v834 = vshrl.u32 %v833, 7
      %v835 = vsub.s32 7, %v834
      %v836 = vrot.slane %v661, %v835
      %v837 = vlaneseq
      %v838 = vshrl.u32 %v837, 7
      %v839 = vsub.s32 7, %v838
      %v840 = vrot.slane %v662, %v839
      %v841 = vmul.f32 %v829, %v836
      %v842 = vmul.f32 %v831, %v840
      %v843 = vmul.f32 %v830, %v836
      %v844 = vmul.f32 %v832, %v840
      %845 = vrot.lane.b32.xlu0 %v657, 111
      %v846 = vpop.permute.xlu0 %845
      %847 = vrot.lane.b32.xlu0 %v659, 111
      %v848 = vpop.permute.xlu0 %847
      %849 = vrot.lane.b32.xlu0 %v658, 111
      %v850 = vpop.permute.xlu0 %849
      %851 = vrot.lane.b32.xlu0 %v660, 111
      %v852 = vpop.permute.xlu0 %851
      %vm853 = vcmp.lt.s32.totalorder %v677, 111
      %v854 = vsel %vm853, %v846, %v850
      %v855 = vsel %vm853, %v848, %v852
      %v856 = vsel %vm853, %v850, %v846
      %v857 = vsel %vm853, %v852, %v848
      %v858 = vlaneseq
      %v859 = vshrl.u32 %v858, 7
      %v860 = vsub.s32 0, %v859
      %v861 = vrot.slane %v663, %v860
      %v862 = vlaneseq
      %v863 = vshrl.u32 %v862, 7
      %v864 = vsub.s32 0, %v863
      %v865 = vrot.slane %v664, %v864
      %v866 = vmul.f32 %v854, %v861
      %v867 = vmul.f32 %v856, %v865
      %v868 = vmul.f32 %v855, %v861
      %v869 = vmul.f32 %v857, %v865
      %871 = vset.pattern.permute.xlu0 0
      %872 = vperm.xlu0 %871, %v667
      %v873 = vpop.permute.xlu0 %872
      %vm875 = vcmask 130048
      %v877 = vsel %vm875, %v666, 0
      %879 = vmatprep.subr.mxu0 %v844
      %880 = vmatpush1.msra.mxu0 %v843
      %881 = vmatprep.subr.mxu0 %v842
      %882 = vmatpush1.msra.mxu0 %v841
      %883 = vmatprep.subr.mxu0 %v819
      %884 = vmatpush1.msra.mxu0 %v818
      %885 = vmatprep.subr.mxu0 %v817
      %886 = vmatpush1.msra.mxu0 %v816
      %887 = vmatprep.subr.mxu0 %v794
      %888 = vmatpush1.msra.mxu0 %v793
      %889 = vmatprep.subr.mxu0 %v792
      %890 = vmatpush1.msra.mxu0 %v791
      %891 = vmatprep.subr.mxu0 %v660
      %892 = vmatpush1.msra.mxu0 %v659
      %893 = vmatprep.subr.mxu0 %v658
      %894 = vmatpush1.msra.mxu0 %v657
      %895 = vmatprep.subr.mxu0 %v769
      %896 = vmatpush1.msra.mxu0 %v768
      %897 = vmatprep.subr.mxu0 %v767
      %898 = vmatpush1.msra.mxu0 %v766
      %899 = vmatprep.subr.mxu0 %v744
      %900 = vmatpush1.msra.mxu0 %v743
      %901 = vmatprep.subr.mxu0 %v742
      %902 = vmatpush1.msra.mxu0 %v741
      %903 = vmatprep.subr.mxu0 %v719
      %904 = vmatpush1.msra.mxu0 %v718
      %905 = vmatprep.subr.mxu0 %v717
      %906 = vmatpush1.msra.mxu0 %v716
      %907 = vmatprep.subr.mxu0 %v694
      %908 = vmatpush1.msra.mxu0 %v693
      %909 = vmatprep.subr.mxu0 %v692
      %910 = vmatpush1.msra.mxu0 %v691
      %911 = vmatprep.subr.mxu0 0.0
      %912 = vmatpush2.msra.mxu0 0.0
      %913 = vmatprep.subr.mxu0 0.0
      %914 = vmatpush2.msra.mxu0 0.0
      %915 = vmatprep.subr.mxu0 0.0
      %916 = vmatpush2.msra.mxu0 0.0
      %917 = vmatprep.subr.mxu0 0.0
      %918 = vmatpush2.msra.mxu0 0.0
      %919 = vmatprep.subr.mxu0 0.0
      %920 = vmatpush2.msra.mxu0 0.0
      %921 = vmatprep.subr.mxu0 0.0
      %922 = vmatpush2.msra.mxu0 0.0
      %923 = vmatprep.subr.mxu0 0.0
      %924 = vmatpush2.msra.mxu0 0.0
      %925 = vmatprep.subr.mxu0 0.0
      %926 = vmatpush2.msra.mxu0 0.0
      %927 = vmatprep.subr.mxu0 0.0
      %928 = vmatpush2.msra.mxu0 0.0
      %929 = vmatprep.subr.mxu0 0.0
      %930 = vmatpush2.msra.mxu0 0.0
      %931 = vmatprep.subr.mxu0 0.0
      %932 = vmatpush2.msra.mxu0 0.0
      %933 = vmatprep.subr.mxu0 0.0
      %934 = vmatpush2.msra.mxu0 0.0
      %935 = vmatprep.subr.mxu0 0.0
      %936 = vmatpush2.msra.mxu0 0.0
      %937 = vmatprep.subr.mxu0 0.0
      %938 = vmatpush2.msra.mxu0 0.0
      %939 = vmatprep.subr.mxu0 %v869
      %940 = vmatpush2.msra.mxu0 %v868
      %941 = vmatprep.subr.mxu0 %v867
      %942 = vmatpush2.msra.mxu0 %v866
      %943 = vmatprep.mubr.f32.mxu0 %v877
      %944 = vmatmul.mubr.f32.gmra.mxu0 %v665
      %v945 = vpop.f32.mrf.mxu0
      %v946 = vadd.f32 %v873, %v945
      %v947 = vpop.f32.mrf.mxu0
      %v948 = vadd.f32 %v873, %v947
      %949 = vdwg.mxu0
      %v950 = vmax.f32 %v946, 0.0
      %v951 = vmax.f32 %v948, 0.0
      %v952 = vld [vmem:[%s7] sm:$0xff]
      %v953 = vld [vmem:[%s8] sm:$0xff]
      %954 = vrot.lane.b32.xlu0 %v950, 17
      %v955 = vpop.permute.xlu0 %954
      %956 = vrot.lane.b32.xlu0 %v951, 17
      %v957 = vpop.permute.xlu0 %956
      %v958 = vsel %vm678, %v955, %v957
      %v959 = vsel %vm678, %v957, %v955
      %v960 = vmul.f32 %v959, %v686
      %v961 = vmul.f32 %v958, %v690
      %962 = vrot.lane.b32.xlu0 %v950, 16
      %v963 = vpop.permute.xlu0 %962
      %964 = vrot.lane.b32.xlu0 %v951, 16
      %v965 = vpop.permute.xlu0 %964
      %v966 = vsel %vm703, %v963, %v965
      %v967 = vsel %vm703, %v965, %v963
      %v968 = vmul.f32 %v967, %v711
      %v969 = vmul.f32 %v966, %v715
      %970 = vrot.lane.b32.xlu0 %v950, 15
      %v971 = vpop.permute.xlu0 %970
      %972 = vrot.lane.b32.xlu0 %v951, 15
      %v973 = vpop.permute.xlu0 %972
      %v974 = vsel %vm728, %v971, %v973
      %v975 = vsel %vm728, %v973, %v971
      %v976 = vmul.f32 %v975, %v736
      %v977 = vmul.f32 %v974, %v740
      %978 = vrot.lane.b32.xlu0 %v950, 1
      %v979 = vpop.permute.xlu0 %978
      %980 = vrot.lane.b32.xlu0 %v951, 1
      %v981 = vpop.permute.xlu0 %980
      %v982 = vsel %vm753, %v979, %v981
      %v983 = vsel %vm753, %v981, %v979
      %v984 = vmul.f32 %v983, %v761
      %v985 = vmul.f32 %v982, %v765
      %986 = vrot.lane.b32.xlu0 %v950, 127
      %v987 = vpop.permute.xlu0 %986
      %988 = vrot.lane.b32.xlu0 %v951, 127
      %v989 = vpop.permute.xlu0 %988
      %v990 = vsel %vm778, %v987, %v989
      %v991 = vsel %vm778, %v989, %v987
      %v992 = vmul.f32 %v990, %v786
      %v993 = vmul.f32 %v991, %v790
      %994 = vrot.lane.b32.xlu0 %v950, 113
      %v995 = vpop.permute.xlu0 %994
      %996 = vrot.lane.b32.xlu0 %v951, 113
      %v997 = vpop.permute.xlu0 %996
      %v998 = vsel %vm803, %v995, %v997
      %v999 = vsel %vm803, %v997, %v995
      %v1000 = vmul.f32 %v998, %v811
      %v1001 = vmul.f32 %v999, %v815
      %1002 = vrot.lane.b32.xlu0 %v950, 112
      %v1003 = vpop.permute.xlu0 %1002
      %1004 = vrot.lane.b32.xlu0 %v951, 112
      %v1005 = vpop.permute.xlu0 %1004
      %v1006 = vsel %vm828, %v1003, %v1005
      %v1007 = vsel %vm828, %v1005, %v1003
      %v1008 = vmul.f32 %v1006, %v836
      %v1009 = vmul.f32 %v1007, %v840
      %1010 = vrot.lane.b32.xlu0 %v950, 111
      %v1011 = vpop.permute.xlu0 %1010
      %1012 = vrot.lane.b32.xlu0 %v951, 111
      %v1013 = vpop.permute.xlu0 %1012
      %v1014 = vsel %vm853, %v1011, %v1013
      %v1015 = vsel %vm853, %v1013, %v1011
      %v1016 = vmul.f32 %v1014, %v861
      %v1017 = vmul.f32 %v1015, %v865
      %1019 = vset.pattern.permute.xlu0 0
      %1020 = vperm.xlu0 %1019, %v953
      %v1021 = vpop.permute.xlu0 %1020
      %vm1023 = vcmask 588800
      %v1025 = vsel %vm1023, %v952, 0
      %1027 = vmatprep.subr.mxu0 0.0
      %1028 = vmatpush1.msra.mxu0 0.0
      %1029 = vmatprep.subr.mxu0 0.0
      %1030 = vmatpush1.msra.mxu0 0.0
      %1031 = vmatprep.subr.mxu0 0.0
      %1032 = vmatpush1.msra.mxu0 0.0
      %1033 = vmatprep.subr.mxu0 0.0
      %1034 = vmatpush1.msra.mxu0 0.0
      %1035 = vmatprep.subr.mxu0 0.0
      %1036 = vmatpush1.msra.mxu0 0.0
      %1037 = vmatprep.subr.mxu0 0.0
      %1038 = vmatpush1.msra.mxu0 0.0
      %1039 = vmatprep.subr.mxu0 0.0
      %1040 = vmatpush1.msra.mxu0 0.0
      %1041 = vmatprep.subr.mxu0 %v1017
      %1042 = vmatpush1.msra.mxu0 %v1016
      %1043 = vmatprep.subr.mxu0 %v1009
      %1044 = vmatpush1.msra.mxu0 %v1008
      %1045 = vmatprep.subr.mxu0 %v1001
      %1046 = vmatpush1.msra.mxu0 %v1000
      %1047 = vmatprep.subr.mxu0 %v993
      %1048 = vmatpush1.msra.mxu0 %v992
      %1049 = vmatprep.subr.mxu0 %v951
      %1050 = vmatpush1.msra.mxu0 %v950
      %1051 = vmatprep.subr.mxu0 %v985
      %1052 = vmatpush1.msra.mxu0 %v984
      %1053 = vmatprep.subr.mxu0 %v977
      %1054 = vmatpush1.msra.mxu0 %v976
      %1055 = vmatprep.subr.mxu0 %v969
      %1056 = vmatpush1.msra.mxu0 %v968
      %1057 = vmatprep.subr.mxu0 %v961
      %1058 = vmatpush1.msra.mxu0 %v960
      %1059 = vmatprep.subr.mxu0 0.0
      %1060 = vmatpush2.msra.mxu0 0.0
      %1061 = vmatprep.subr.mxu0 0.0
      %1062 = vmatpush2.msra.mxu0 0.0
      %1063 = vmatprep.subr.mxu0 0.0
      %1064 = vmatpush2.msra.mxu0 0.0
      %1065 = vmatprep.subr.mxu0 0.0
      %1066 = vmatpush2.msra.mxu0 0.0
      %1067 = vmatprep.subr.mxu0 0.0
      %1068 = vmatpush2.msra.mxu0 0.0
      %1069 = vmatprep.subr.mxu0 0.0
      %1070 = vmatpush2.msra.mxu0 0.0
      %1071 = vmatprep.subr.mxu0 0.0
      %1072 = vmatpush2.msra.mxu0 0.0
      %1073 = vmatprep.subr.mxu0 0.0
      %1074 = vmatpush2.msra.mxu0 0.0
      %1075 = vmatprep.subr.mxu0 0.0
      %1076 = vmatpush2.msra.mxu0 0.0
      %1077 = vmatprep.subr.mxu0 0.0
      %1078 = vmatpush2.msra.mxu0 0.0
      %1079 = vmatprep.subr.mxu0 0.0
      %1080 = vmatpush2.msra.mxu0 0.0
      %1081 = vmatprep.subr.mxu0 0.0
      %1082 = vmatpush2.msra.mxu0 0.0
      %1083 = vmatprep.subr.mxu0 0.0
      %1084 = vmatpush2.msra.mxu0 0.0
      %1085 = vmatprep.subr.mxu0 0.0
      %1086 = vmatpush2.msra.mxu0 0.0
      %1087 = vmatprep.subr.mxu0 0.0
      %1088 = vmatpush2.msra.mxu0 0.0
      %1089 = vmatprep.subr.mxu0 0.0
      %1090 = vmatpush2.msra.mxu0 0.0
      %1091 = vmatprep.mubr.f32.mxu0 0.0
      %1092 = vmatmul.mubr.f32.gmra.mxu0 %v1025
      %v1093 = vpop.f32.mrf.mxu0
      %v1094 = vadd.f32 %v1021, %v1093
      %v1095 = vpop.f32.mrf.mxu0
      %v1096 = vadd.f32 %v1021, %v1095
      %1097 = vdwg.mxu0
      %v1098 = vmax.f32 %v1094, 0.0
      %v1099 = vmax.f32 %v1096, 0.0
      %1100 = vst [vmem:[%s446] sm:$0xff] %v1098
      %1101 = vst [vmem:[%s446 + $0x8] sm:$0xff] %v1099
      %v1102 = vadd.f32 %v1098, %v1099
      %1103 = vadd.xlane.f32.xlu0 %v1102
      %v1104 = vpop.xlane.xlu0 %1103
      %vm1105 = vcmask 7168
      %1106 = vst.msk [vmem:[%s450] sm:$0xff] %vm1105, %v1104
      %v1107 = vmul.f32 %v1098, %v1098
      %v1108 = vmul.f32 %v1099, %v1099
      %v1109 = vadd.f32 %v1107, %v1108
      %1110 = vadd.xlane.f32.xlu0 %v1109
      %v1111 = vpop.xlane.xlu0 %1110
      %1112 = vst.msk [vmem:[%s454] sm:$0xff] %vm1105, %v1111
      %p1113 = scmp.lt.s32.totalorder %s24, 1
      %s1114 = scalar_select %p1113, %s24, 1
      %s1115 = smul.addr %s1114, 2
      %s1116 = smul.addr %s1115, 8
      %s1117 = scalar_lea.vmem %s10, %s1116
      %p1118 = scmp.lt.s32.totalorder %s24, 1
      %s1119 = scalar_select %p1118, %s24, 1
      %s1120 = smul.addr %s1119, 8
      %s1121 = scalar_lea.vmem %s11, %s1120
      %p1122 = scmp.lt.s32.totalorder %s24, 1
      %s1123 = scalar_select %p1122, %s24, 1
      %s1124 = smul.addr %s1123, 8
      %s1125 = scalar_lea.vmem %s12, %s1124
      // Predicated region
      $region61: #{unet_block_forward.2} parent=59 // pred_check
        %p1126 = pneg %p262
      $region62: #{unet_block_forward.2} parent=59 // pred_check_branch
        %1128 = sbr.rel (%p1126) target = $region64
      $region63: #{unet_block_forward.2} parent=59 // pred_region
        _
      $region64: #{unet_block_forward.2} parent=59 // pred_fallthru
        _
      // Predicated region
      $region65: #{unet_block_forward.2} parent=59 // pred_check
        %p1129 = pneg %p288
      $region66: #{unet_block_forward.2} parent=59 // pred_check_branch
        %1131 = sbr.rel (%p1129) target = $region68
      $region67: #{unet_block_forward.2} parent=59 // pred_region
        _
      $region68: #{unet_block_forward.2} parent=59 // pred_fallthru
        _
      // Predicated region
      $region69: #{unet_block_forward.2} parent=59 // pred_check
        %p1132 = pneg %p314
      $region70: #{unet_block_forward.2} parent=59 // pred_check_branch
        %1134 = sbr.rel (%p1132) target = $region72
      $region71: #{unet_block_forward.2} parent=59 // pred_region
        _
      $region72: #{unet_block_forward.2} parent=59 // pred_fallthru
        _
    $region60: #{unet_block_forward.2} parent=5 // pred_fallthru
      _
    %p1135 = scmp.le.s32.totalorder 2, %s19
    // Predicated region
    $region73: #{unet_block_forward.2} parent=5 // pred_check
      %p1136 = pneg %p1135
    $region74: #{unet_block_forward.2} parent=5 // pred_check_branch
      %1138 = sbr.rel (%p1136) target = $region76
    $region75: #{unet_block_forward.2} parent=5 // pred_region
      %s1139 = ssub.s32 %s19, 2
      // Predicated region
      $region77: #{unet_block_forward.2} parent=75 // pred_check
        %p1140 = pneg %p268
      $region78: #{unet_block_forward.2} parent=75 // pred_check_branch
        %1142 = sbr.rel (%p1140) target = $region80
      $region79: #{unet_block_forward.2} parent=75 // pred_region
        %p1143 = scmp.lt.s32.totalorder %s25, 1
        %s1144 = scalar_select %p1143, %s25, 1
        %s1145 = smul.addr %s1144, 2
        %s1146 = smul.addr %s1145, 8
        %s1147 = scalar_lea.vmem %s10, %s1146
      $region80: #{unet_block_forward.2} parent=75 // pred_fallthru
        _
      // Predicated region
      $region81: #{unet_block_forward.2} parent=75 // pred_check
        %p1148 = pneg %p294
      $region82: #{unet_block_forward.2} parent=75 // pred_check_branch
        %1150 = sbr.rel (%p1148) target = $region84
      $region83: #{unet_block_forward.2} parent=75 // pred_region
        %p1151 = scmp.lt.s32.totalorder %s25, 1
        %s1152 = scalar_select %p1151, %s25, 1
        %s1153 = smul.addr %s1152, 8
        %s1154 = scalar_lea.vmem %s11, %s1153
      $region84: #{unet_block_forward.2} parent=75 // pred_fallthru
        _
      // Predicated region
      $region85: #{unet_block_forward.2} parent=75 // pred_check
        %p1155 = pneg %p320
      $region86: #{unet_block_forward.2} parent=75 // pred_check_branch
        %1157 = sbr.rel (%p1155) target = $region88
      $region87: #{unet_block_forward.2} parent=75 // pred_region
        %p1158 = scmp.lt.s32.totalorder %s25, 1
        %s1159 = scalar_select %p1158, %s25, 1
        %s1160 = smul.addr %s1159, 8
        %s1161 = scalar_lea.vmem %s12, %s1160
      $region88: #{unet_block_forward.2} parent=75 // pred_fallthru
        _
    $region76: #{unet_block_forward.2} parent=5 // pred_fallthru
      _
  $region6: #{unet_block_forward.2} parent=0 // loop_footer
    %s23 = sadd.s32 1, %s19
  $region7: #{unet_block_forward.2} parent=0 // loop_footer_branch
    %18 = sbr.rel target = $region3
  $region8: #{unet_block_forward.2} parent=0 // loop_exit
    _

</llo_original>
